<compile_context>
chip_gen: v7x
topology: tpu7x:2x2x1
jax: 0.10.0
libtpu: 0.0.40
codegen_flags: <defaults>
</compile_context>

<pallas_src>
import math

import jax
import jax.numpy as jnp
import numpy as np
from jax import lax
from jax.experimental import pallas as pl
from jax.experimental.pallas import tpu as pltpu

_BN_EPS = 1e-5
_BN_INV_STD = 1.0 / math.sqrt(1.0 + _BN_EPS)  # eval-mode BN, running stats (0, 1)


# ----------------------------- helpers ------------------------------------- #

def _padded_bytes(shape, itemsize=4):
    """f32 VMEM footprint of `shape` after (8, 128) tile padding."""
    s = list(shape)
    s[-1] = -(-s[-1] // 128) * 128
    if len(s) >= 2:
        s[-2] = -(-s[-2] // 8) * 8
    return itemsize * int(np.prod(s))


def _pool2x2_transposed(scr_ref, H, W):
    """2x2 max-pool of a (H*W, Ci) VMEM scratch holding a projected branch with
    the spatial index (h*W + w, natural raster) on the sublane axis.

    Returns a (P, Ci) value, P = (H//2)*(W//2), pooled raster order hp*Wp + wp.
    Uses only first-axis strided pl.ds reads and leading-dim split/merge
    reshapes (layout-cheap when W and W//2 are multiples of 8)."""
    HW = H * W
    Hp, Wp = H // 2, W // 2
    ci = scr_ref.shape[-1]
    even_w = scr_ref[pl.ds(0, HW // 2, stride=2), :]     # (H*Wp, Ci): cols 0,2,...
    odd_w = scr_ref[pl.ds(1, HW // 2, stride=2), :]      # (H*Wp, Ci): cols 1,3,...
    col_max = jnp.maximum(even_w, odd_w)                 # flat index h*Wp + wp
    row_pairs = col_max.reshape(Hp, 2 * Wp, ci)          # rows 2j | 2j+1 per block
    pooled = jnp.maximum(row_pairs[:, :Wp, :], row_pairs[:, Wp:, :])  # (Hp, Wp, Ci)
    return pooled.reshape(Hp * Wp, ci)                   # (P, Ci)


# ------------------------------ host wrapper ------------------------------- #

def nl_wrapper_forward(feature, mask, params, *, tq=256):
    """Equivalent of the rasc.py attention wrapper: attention(feature); mask unused."""
    del mask  # the PyTorch forward never uses it
    B, C, H, W = feature.shape                           # NCHW, like PyTorch
    assert H % 2 == 0 and W % 2 == 0, "2x2 max-pool sub-sampling needs even H, W"
    HW = H * W
    Hp, Wp = H // 2, W // 2
    P = Hp * Wp
    Ci = params["w_theta"].shape[0]

    x = feature.astype(jnp.float32).reshape(B, C, HW)    # spatial-last, free reshape

    # Query tile: multiple of 128 and divisor of HW whenever possible.
    tq = min(tq, HW)
    while HW % tq:
        tq //= 2
    nq = HW // tq

    # Host-side constant folding: BN affine + output-conv bias + g-branch bias.
    scale = params["gamma"].astype(jnp.float32) * _BN_INV_STD            # (C, 1)
    w_out = (scale * params["w_w"]).astype(jnp.float32)                  # (C, Ci)
    b_out = (scale * (params["w_w"] @ params["b_g"] + params["b_w"])
             + params["beta"]).astype(jnp.float32)                       # (C, 1)
    b_phi_row = params["b_phi"].reshape(1, Ci).astype(jnp.float32)       # (1, Ci)
    w_theta = params["w_theta"].astype(jnp.float32)
    b_theta = params["b_theta"].astype(jnp.float32)
    w_phi = params["w_phi"].astype(jnp.float32)
    w_g = params["w_g"].astype(jnp.float32)

    def kernel(x_ref, w_th_ref, b_th_ref, w_ph_ref, b_ph_row_ref,
               w_g_ref, w_out_ref, b_out_ref,
               out_ref, proj_scr, phiT_scr, wg_scr):
        # x_ref    : (1, C, HW)  per-batch resident feature map (natural raster)
        # w_*      : projection weights/biases; w_out/b_out have BN folded in
        # out_ref  : (1, C, tq)
        # proj_scr : (HW, Ci)  projection scratch (spatial on sublanes)
        # phiT_scr : (P, Ci)   pooled phi (keys on sublanes), persists over q
        # wg_scr   : (C, P)    (gamma/std * W_z) @ pooled_g^T, persists over q
        q = pl.program_id(1)

        # ---- once per batch element: phi/g projection + 2x2 max-pool -------- #
        @pl.when(q == 0)
        def _():
            x_full = x_ref[0]                                            # (C, HW)
            # phi: project with spatial on sublanes, pool, add bias.
            proj_scr[...] = lax.dot_general(
                x_full, w_ph_ref[...], (((0,), (1,)), ((), ())),
                preferred_element_type=jnp.float32)                      # (HW, Ci)
            phiT_scr[...] = _pool2x2_transposed(proj_scr, H, W) + b_ph_row_ref[...]
            # g: project, pool, fold the output 1x1 conv (+BN scale) in.
            proj_scr[...] = lax.dot_general(
                x_full, w_g_ref[...], (((0,), (1,)), ((), ())),
                preferred_element_type=jnp.float32)                      # (HW, Ci)
            g_pooled = _pool2x2_transposed(proj_scr, H, W)               # (P, Ci)
            wg_scr[...] = lax.dot_general(
                w_out_ref[...], g_pooled, (((1,), (1,)), ((), ())),
                preferred_element_type=jnp.float32)                      # (C, P)

        # ---- every query tile (sliced from the resident block) -------------- #
        start = pl.multiple_of(q * tq, tq)
        xq = x_ref[0, :, pl.ds(start, tq)]                               # (C, tq)
        theta = jnp.dot(w_th_ref[...], xq,
                        preferred_element_type=jnp.float32) + b_th_ref[...]  # (Ci, tq)

        # scores with keys on sublanes: f[k, q] = <phi_k, theta_q>
        f = jnp.dot(phiT_scr[...], theta,
                    preferred_element_type=jnp.float32)                  # (P, tq)
        m = jnp.max(f, axis=0, keepdims=True)                            # (1, tq)
        e = jnp.exp(f - m)                                               # (P, tq)
        s = jnp.sum(e, axis=0, keepdims=True)                            # (1, tq)
        inv = pl.reciprocal(s, approx=True)                              # EUP
        inv = inv * (2.0 - s * inv)                                      # Newton -> f32

        # value matmul with folded W/BN; normalize afterwards (per-query scale).
        wy = jnp.dot(wg_scr[...], e, preferred_element_type=jnp.float32)  # (C, tq)
        out_ref[0] = (wy * inv + b_out_ref[...] + xq).astype(out_ref.dtype)

    # Size-derived VMEM budget (inputs/outputs double-buffered, scratches,
    # plus an allowance for score/projection temporaries), with headroom.
    need = (2 * _padded_bytes((1, C, HW))
            + 2 * _padded_bytes((1, C, tq))
            + _padded_bytes((HW, Ci)) + _padded_bytes((P, Ci)) + _padded_bytes((C, P))
            + 3 * _padded_bytes((P, tq))
            + 2 * _padded_bytes((C, tq))
            + _padded_bytes((HW, Ci)))
    vmem_limit = int(min(max(2 * need, 16 * 1024 * 1024), 96 * 1024 * 1024))
    # TODO(synk): on v7x (64 MiB VMEM) clamp via pltpu.get_tpu_info and consider
    # pipeline_mode=pl.Buffered(1) on the per-batch x block.

    param_elems = 3 * Ci * C + 2 * Ci + C * Ci + 2 * C
    cost = pl.CostEstimate(
        flops=int(B * (2 * 3 * Ci * C * HW      # theta/phi/g 1x1 projections
                       + 2 * C * Ci * P         # folded W conv on pooled g
                       + 2 * Ci * P * HW        # scores
                       + 2 * C * P * HW)),      # value matmul
        transcendentals=int(B * (P * HW + HW)),
        bytes_accessed=int(4 * (2 * B * C * HW + param_elems)),
    )

    full2d = lambda shape: pl.BlockSpec(shape, lambda b, q: (0, 0))

    out = pl.pallas_call(
        kernel,
        out_shape=jax.ShapeDtypeStruct((B, C, HW), jnp.float32),
        grid=(B, nq),
        in_specs=[
            pl.BlockSpec((1, C, HW), lambda b, q: (b, 0, 0)),   # x, per-batch resident
            full2d((Ci, C)), full2d((Ci, 1)),                   # theta
            full2d((Ci, C)), full2d((1, Ci)),                   # phi
            full2d((Ci, C)),                                    # g
            full2d((C, Ci)), full2d((C, 1)),                    # folded W / bias
        ],
        out_specs=pl.BlockSpec((1, C, tq), lambda b, q: (b, 0, q)),
        scratch_shapes=[pltpu.VMEM((HW, Ci), jnp.float32),      # projection scratch
                        pltpu.VMEM((P, Ci), jnp.float32),       # pooled phi (keys)
                        pltpu.VMEM((C, P), jnp.float32)],       # folded W @ pooled g
        compiler_params=pltpu.CompilerParams(
            # q must stay "arbitrary": phi/g/wg scratches are produced at the
            # first query tile of each batch element and reused across q.
            dimension_semantics=("parallel", "arbitrary"),
            vmem_limit_bytes=vmem_limit),
        cost_estimate=cost,
    )(x, w_theta, b_theta, w_phi, b_phi_row, w_g, w_out, b_out)
    return out.reshape(B, C, H, W)


# ------------------------------ params / ref -------------------------------- #

def init_params(key, C):
    Ci = max(C // 2, 1)
    ks = jax.random.split(key, 8)
    n = lambda k, s: 0.1 * jax.random.normal(k, s, dtype=jnp.float32)
    return dict(
        w_theta=n(ks[0], (Ci, C)), b_theta=n(ks[1], (Ci, 1)),
        w_phi=n(ks[2], (Ci, C)),   b_phi=n(ks[3], (Ci, 1)),
        w_g=n(ks[4], (Ci, C)),     b_g=n(ks[5], (Ci, 1)),
        w_w=n(ks[6], (C, Ci)),     b_w=n(ks[7], (C, 1)),
        # NOTE: the real block zero-inits the BN affine (output == input at
        # init); use non-trivial values so the attention path is exercised.
        gamma=jnp.full((C, 1), 1.0, jnp.float32),
        beta=jnp.full((C, 1), 0.1, jnp.float32),
    )


def reference_forward(feature, params):
    """Pure-JAX mirror of the PyTorch non-local attention block (eval-mode BN)."""
    B, C, H, W = feature.shape
    Ci = params["w_theta"].shape[0]
    hp = jax.lax.Precision.HIGHEST
    x = feature.astype(jnp.float32).reshape(B, C, H * W)
    th = jnp.einsum("oc,bcs->bos", params["w_theta"], x, precision=hp) + params["b_theta"][None]
    ph = jnp.einsum("oc,bcs->bos", params["w_phi"], x, precision=hp) + params["b_phi"][None]
    g = jnp.einsum("oc,bcs->bos", params["w_g"], x, precision=hp) + params["b_g"][None]

    def pool(a):
        a = a.reshape(B, Ci, H // 2, 2, W // 2, 2)
        return a.max(axis=(3, 5)).reshape(B, Ci, -1)

    ph, g = pool(ph), pool(g)
    f = jnp.einsum("bcq,bck->bqk", th, ph, precision=hp)
    f = jax.nn.softmax(f, axis=-1)
    y = jnp.einsum("bqk,bck->bcq", f, g, precision=hp)
    wy = jnp.einsum("oc,bcq->boq", params["w_w"], y, precision=hp) + params["b_w"][None]
    wy = params["gamma"][None] * wy * _BN_INV_STD + params["beta"][None]
    return (wy + x).reshape(B, C, H, W)


if __name__ == "__main__":
    key = jax.random.PRNGKey(0)
    kf, km, kp = jax.random.split(key, 3)
    B, C, H, W = 2, 8, 16, 16
    feature = jax.random.normal(kf, (B, C, H, W), dtype=jnp.float32)
    mask = jax.random.normal(km, (B, 1, H, W), dtype=jnp.float32)
    params = init_params(kp, C)

    out = jax.block_until_ready(nl_wrapper_forward(feature, mask, params))
    ref = reference_forward(feature, params)

    assert out.shape == (B, C, H, W)
    np.testing.assert_allclose(np.asarray(out), np.asarray(ref), rtol=2e-4, atol=2e-4)
    print("KERNEL_OK")
</pallas_src>

<mosaic_0001>
module attributes {stable_mosaic.version = 11 : i64} {
  func.func @kernel(%arg0: i32, %arg1: i32, %arg2: memref<1x8x256xf32, #tpu.memory_space<vmem>>, %arg3: memref<4x8xf32, #tpu.memory_space<vmem>>, %arg4: memref<4x1xf32, #tpu.memory_space<vmem>>, %arg5: memref<4x8xf32, #tpu.memory_space<vmem>>, %arg6: memref<1x4xf32, #tpu.memory_space<vmem>>, %arg7: memref<4x8xf32, #tpu.memory_space<vmem>>, %arg8: memref<8x4xf32, #tpu.memory_space<vmem>>, %arg9: memref<8x1xf32, #tpu.memory_space<vmem>>, %arg10: memref<1x8x256xf32, #tpu.memory_space<vmem>>, %arg11: memref<256x4xf32, #tpu.memory_space<vmem>>, %arg12: memref<64x4xf32, #tpu.memory_space<vmem>>, %arg13: memref<8x64xf32, #tpu.memory_space<vmem>>) attributes {dimension_semantics = [#tpu.dimension_semantics<parallel>, #tpu.dimension_semantics<arbitrary>], iteration_bounds = array<i64: 2, 1>, scalar_prefetch = 0 : i64, scratch_operands = 3 : i64, tpu.core_type = #tpu.core_type<tc>, window_params = [{transform_indices = @transform_0, window_bounds = array<i64: 1, 8, 256>}, {pipeline_mode = #tpu.pipeline_mode<synchronous>, transform_indices = @transform_1, window_bounds = array<i64: 4, 8>}, {pipeline_mode = #tpu.pipeline_mode<synchronous>, transform_indices = @transform_2, window_bounds = array<i64: 4, 1>}, {pipeline_mode = #tpu.pipeline_mode<synchronous>, transform_indices = @transform_3, window_bounds = array<i64: 4, 8>}, {pipeline_mode = #tpu.pipeline_mode<synchronous>, transform_indices = @transform_4, window_bounds = array<i64: 1, 4>}, {pipeline_mode = #tpu.pipeline_mode<synchronous>, transform_indices = @transform_5, window_bounds = array<i64: 4, 8>}, {pipeline_mode = #tpu.pipeline_mode<synchronous>, transform_indices = @transform_6, window_bounds = array<i64: 8, 4>}, {pipeline_mode = #tpu.pipeline_mode<synchronous>, transform_indices = @transform_7, window_bounds = array<i64: 8, 1>}, {transform_indices = @transform_8, window_bounds = array<i64: 1, 8, 256>}]} {
    %c0_i32 = arith.constant 0 : i32
    %0 = arith.cmpi eq, %arg1, %c0_i32 : i32
    %1 = arith.extui %0 : i1 to i32
    %c0_i32_0 = arith.constant 0 : i32
    %2 = arith.cmpi ne, %1, %c0_i32_0 : i32
    scf.if %2 {
      %c0_20 = arith.constant 0 : index
      %c0_21 = arith.constant 0 : index
      %c0_22 = arith.constant 0 : index
      %38 = vector.load %arg2[%c0_20, %c0_21, %c0_22] : memref<1x8x256xf32, #tpu.memory_space<vmem>>, vector<1x8x256xf32>
      %39 = vector.shape_cast %38 : vector<1x8x256xf32> to vector<8x256xf32>
      %c0_23 = arith.constant 0 : index
      %c0_24 = arith.constant 0 : index
      %40 = vector.load %arg5[%c0_23, %c0_24] : memref<4x8xf32, #tpu.memory_space<vmem>>, vector<4x8xf32>
      %cst_25 = arith.constant dense<0.000000e+00> : vector<256x4xf32>
      %41 = tpu.matmul %39, %40, %cst_25 {dimension_numbers = #tpu.dot_dimension_numbers<[0], [1], [1], [0], [0, 1, 1, 0], [], []>} : vector<8x256xf32>, vector<4x8xf32>, vector<256x4xf32> -> vector<256x4xf32>
      %c0_26 = arith.constant 0 : index
      %c0_27 = arith.constant 0 : index
      %42 = vector.load %arg11[%c0_26, %c0_27] : memref<256x4xf32, #tpu.memory_space<vmem>>, vector<256x4xf32>
      tpu.vector_store %arg11[%c0_26, %c0_27], %41 {strides = array<i32>} : memref<256x4xf32, #tpu.memory_space<vmem>>, vector<256x4xf32>,
      %c0_28 = arith.constant 0 : index
      %c0_29 = arith.constant 0 : index
      %43 = tpu.strided_load %arg11[%c0_28, %c0_29] {strides = array<i32: 2, 1>} : memref<256x4xf32, #tpu.memory_space<vmem>>, vector<128x4xf32>
      %c1 = arith.constant 1 : index
      %c0_30 = arith.constant 0 : index
      %44 = tpu.strided_load %arg11[%c1, %c0_30] {strides = array<i32: 2, 1>} : memref<256x4xf32, #tpu.memory_space<vmem>>, vector<128x4xf32>
      %45 = arith.maximumf %43, %44 : vector<128x4xf32>
      %46 = vector.shape_cast %45 : vector<128x4xf32> to vector<8x16x4xf32>
      %47 = vector.extract_strided_slice %46 {offsets = [0, 0, 0], sizes = [8, 8, 4], strides = [1, 1, 1]} : vector<8x16x4xf32> to vector<8x8x4xf32>
      %48 = vector.extract_strided_slice %46 {offsets = [0, 8, 0], sizes = [8, 8, 4], strides = [1, 1, 1]} : vector<8x16x4xf32> to vector<8x8x4xf32>
      %49 = arith.maximumf %47, %48 : vector<8x8x4xf32>
      %50 = vector.shape_cast %49 : vector<8x8x4xf32> to vector<64x4xf32>
      %c0_31 = arith.constant 0 : index
      %c0_32 = arith.constant 0 : index
      %51 = vector.load %arg6[%c0_31, %c0_32] : memref<1x4xf32, #tpu.memory_space<vmem>>, vector<1x4xf32>
      %52 = vector.broadcast %51 : vector<1x4xf32> to vector<64x4xf32>
      %53 = arith.addf %50, %52 : vector<64x4xf32>
      %c0_33 = arith.constant 0 : index
      %c0_34 = arith.constant 0 : index
      %54 = vector.load %arg12[%c0_33, %c0_34] : memref<64x4xf32, #tpu.memory_space<vmem>>, vector<64x4xf32>
      tpu.vector_store %arg12[%c0_33, %c0_34], %53 {strides = array<i32>} : memref<64x4xf32, #tpu.memory_space<vmem>>, vector<64x4xf32>,
      %c0_35 = arith.constant 0 : index
      %c0_36 = arith.constant 0 : index
      %55 = vector.load %arg7[%c0_35, %c0_36] : memref<4x8xf32, #tpu.memory_space<vmem>>, vector<4x8xf32>
      %cst_37 = arith.constant dense<0.000000e+00> : vector<256x4xf32>
      %56 = tpu.matmul %39, %55, %cst_37 {dimension_numbers = #tpu.dot_dimension_numbers<[0], [1], [1], [0], [0, 1, 1, 0], [], []>} : vector<8x256xf32>, vector<4x8xf32>, vector<256x4xf32> -> vector<256x4xf32>
      %c0_38 = arith.constant 0 : index
      %c0_39 = arith.constant 0 : index
      %57 = vector.load %arg11[%c0_38, %c0_39] : memref<256x4xf32, #tpu.memory_space<vmem>>, vector<256x4xf32>
      tpu.vector_store %arg11[%c0_38, %c0_39], %56 {strides = array<i32>} : memref<256x4xf32, #tpu.memory_space<vmem>>, vector<256x4xf32>,
      %c0_40 = arith.constant 0 : index
      %c0_41 = arith.constant 0 : index
      %58 = tpu.strided_load %arg11[%c0_40, %c0_41] {strides = array<i32: 2, 1>} : memref<256x4xf32, #tpu.memory_space<vmem>>, vector<128x4xf32>
      %c1_42 = arith.constant 1 : index
      %c0_43 = arith.constant 0 : index
      %59 = tpu.strided_load %arg11[%c1_42, %c0_43] {strides = array<i32: 2, 1>} : memref<256x4xf32, #tpu.memory_space<vmem>>, vector<128x4xf32>
      %60 = arith.maximumf %58, %59 : vector<128x4xf32>
      %61 = vector.shape_cast %60 : vector<128x4xf32> to vector<8x16x4xf32>
      %62 = vector.extract_strided_slice %61 {offsets = [0, 0, 0], sizes = [8, 8, 4], strides = [1, 1, 1]} : vector<8x16x4xf32> to vector<8x8x4xf32>
      %63 = vector.extract_strided_slice %61 {offsets = [0, 8, 0], sizes = [8, 8, 4], strides = [1, 1, 1]} : vector<8x16x4xf32> to vector<8x8x4xf32>
      %64 = arith.maximumf %62, %63 : vector<8x8x4xf32>
      %65 = vector.shape_cast %64 : vector<8x8x4xf32> to vector<64x4xf32>
      %c0_44 = arith.constant 0 : index
      %c0_45 = arith.constant 0 : index
      %66 = vector.load %arg8[%c0_44, %c0_45] : memref<8x4xf32, #tpu.memory_space<vmem>>, vector<8x4xf32>
      %cst_46 = arith.constant dense<0.000000e+00> : vector<8x64xf32>
      %67 = tpu.matmul %66, %65, %cst_46 {dimension_numbers = #tpu.dot_dimension_numbers<[1], [1], [0], [0], [0, 0, 1, 0], [], []>} : vector<8x4xf32>, vector<64x4xf32>, vector<8x64xf32> -> vector<8x64xf32>
      %c0_47 = arith.constant 0 : index
      %c0_48 = arith.constant 0 : index
      %68 = vector.load %arg13[%c0_47, %c0_48] : memref<8x64xf32, #tpu.memory_space<vmem>>, vector<8x64xf32>
      tpu.vector_store %arg13[%c0_47, %c0_48], %67 {strides = array<i32>} : memref<8x64xf32, #tpu.memory_space<vmem>>, vector<8x64xf32>,
    } else {
    }
    %c256_i32 = arith.constant 256 : i32
    %3 = arith.muli %arg1, %c256_i32 : i32
    %4 = tpu.assume_multiple %3, 256 : i32
    %c0 = arith.constant 0 : index
    %c0_1 = arith.constant 0 : index
    %5 = arith.index_cast %4 : i32 to index
    %6 = vector.load %arg2[%c0, %c0_1, %5] : memref<1x8x256xf32, #tpu.memory_space<vmem>>, vector<1x8x256xf32>
    %7 = vector.shape_cast %6 : vector<1x8x256xf32> to vector<8x256xf32>
    %c0_2 = arith.constant 0 : index
    %c0_3 = arith.constant 0 : index
    %8 = vector.load %arg3[%c0_2, %c0_3] : memref<4x8xf32, #tpu.memory_space<vmem>>, vector<4x8xf32>
    %cst = arith.constant dense<0.000000e+00> : vector<4x256xf32>
    %9 = tpu.matmul %8, %7, %cst {dimension_numbers = #tpu.dot_dimension_numbers<[1], [0], [0], [1], [0, 0, 1, 1], [], []>} : vector<4x8xf32>, vector<8x256xf32>, vector<4x256xf32> -> vector<4x256xf32>
    %c0_4 = arith.constant 0 : index
    %c0_5 = arith.constant 0 : index
    %10 = vector.load %arg4[%c0_4, %c0_5] : memref<4x1xf32, #tpu.memory_space<vmem>>, vector<4x1xf32>
    %11 = vector.broadcast %10 : vector<4x1xf32> to vector<4x256xf32>
    %12 = arith.addf %9, %11 : vector<4x256xf32>
    %c0_6 = arith.constant 0 : index
    %c0_7 = arith.constant 0 : index
    %13 = vector.load %arg12[%c0_6, %c0_7] : memref<64x4xf32, #tpu.memory_space<vmem>>, vector<64x4xf32>
    %cst_8 = arith.constant dense<0.000000e+00> : vector<64x256xf32>
    %14 = tpu.matmul %13, %12, %cst_8 {dimension_numbers = #tpu.dot_dimension_numbers<[1], [0], [0], [1], [0, 0, 1, 1], [], []>} : vector<64x4xf32>, vector<4x256xf32>, vector<64x256xf32> -> vector<64x256xf32>
    %cst_9 = arith.constant dense<0xFF800000> : vector<256xf32>
    %15 = vector.multi_reduction <maximumf>, %14, %cst_9 [0] : vector<64x256xf32> to vector<256xf32>
    %16 = vector.shape_cast %15 : vector<256xf32> to vector<1x256xf32>
    %17 = vector.broadcast %16 : vector<1x256xf32> to vector<64x256xf32>
    %18 = arith.subf %14, %17 : vector<64x256xf32>
    %19 = math.exp %18 : vector<64x256xf32>
    %cst_10 = arith.constant dense<0.000000e+00> : vector<256xf32>
    %20 = vector.multi_reduction <add>, %19, %cst_10 [0] : vector<64x256xf32> to vector<256xf32>
    %21 = vector.shape_cast %20 : vector<256xf32> to vector<1x256xf32>
    %22 = tpu.reciprocal %21 {approx = true} : vector<1x256xf32> -> vector<1x256xf32>
    %23 = arith.mulf %21, %22 : vector<1x256xf32>
    %cst_11 = arith.constant 2.000000e+00 : f32
    %24 = vector.broadcast %cst_11 : f32 to vector<1x256xf32>
    %25 = arith.subf %24, %23 : vector<1x256xf32>
    %26 = arith.mulf %22, %25 : vector<1x256xf32>
    %c0_12 = arith.constant 0 : index
    %c0_13 = arith.constant 0 : index
    %27 = vector.load %arg13[%c0_12, %c0_13] : memref<8x64xf32, #tpu.memory_space<vmem>>, vector<8x64xf32>
    %cst_14 = arith.constant dense<0.000000e+00> : vector<8x256xf32>
    %28 = tpu.matmul %27, %19, %cst_14 {dimension_numbers = #tpu.dot_dimension_numbers<[1], [0], [0], [1], [0, 0, 1, 1], [], []>} : vector<8x64xf32>, vector<64x256xf32>, vector<8x256xf32> -> vector<8x256xf32>
    %29 = vector.broadcast %26 : vector<1x256xf32> to vector<8x256xf32>
    %30 = arith.mulf %28, %29 : vector<8x256xf32>
    %c0_15 = arith.constant 0 : index
    %c0_16 = arith.constant 0 : index
    %31 = vector.load %arg9[%c0_15, %c0_16] : memref<8x1xf32, #tpu.memory_space<vmem>>, vector<8x1xf32>
    %32 = vector.broadcast %31 : vector<8x1xf32> to vector<8x256xf32>
    %33 = arith.addf %30, %32 : vector<8x256xf32>
    %34 = arith.addf %33, %7 : vector<8x256xf32>
    %c0_17 = arith.constant 0 : index
    %c0_18 = arith.constant 0 : index
    %c0_19 = arith.constant 0 : index
    %35 = vector.load %arg10[%c0_17, %c0_18, %c0_19] : memref<1x8x256xf32, #tpu.memory_space<vmem>>, vector<1x8x256xf32>
    %36 = vector.shape_cast %35 : vector<1x8x256xf32> to vector<8x256xf32>
    %37 = vector.shape_cast %34 : vector<8x256xf32> to vector<1x8x256xf32>
    tpu.vector_store %arg10[%c0_17, %c0_18, %c0_19], %37 {strides = array<i32>} : memref<1x8x256xf32, #tpu.memory_space<vmem>>, vector<1x8x256xf32>,
    return
  }
  func.func @transform_0(%arg0: i32, %arg1: i32) -> (i32, i32, i32) {
    %c0_i32 = arith.constant 0 : i32
    %c0_i32_0 = arith.constant 0 : i32
    %c0_i32_1 = arith.constant 0 : i32
    return %arg0, %c0_i32, %c0_i32_0 : i32, i32, i32
  }
  func.func @transform_1(%arg0: i32, %arg1: i32) -> (i32, i32) {
    %c0_i32 = arith.constant 0 : i32
    %c0_i32_0 = arith.constant 0 : i32
    %c0_i32_1 = arith.constant 0 : i32
    return %c0_i32, %c0_i32_0 : i32, i32
  }
  func.func @transform_2(%arg0: i32, %arg1: i32) -> (i32, i32) {
    %c0_i32 = arith.constant 0 : i32
    %c0_i32_0 = arith.constant 0 : i32
    %c0_i32_1 = arith.constant 0 : i32
    return %c0_i32, %c0_i32_0 : i32, i32
  }
  func.func @transform_3(%arg0: i32, %arg1: i32) -> (i32, i32) {
    %c0_i32 = arith.constant 0 : i32
    %c0_i32_0 = arith.constant 0 : i32
    %c0_i32_1 = arith.constant 0 : i32
    return %c0_i32, %c0_i32_0 : i32, i32
  }
  func.func @transform_4(%arg0: i32, %arg1: i32) -> (i32, i32) {
    %c0_i32 = arith.constant 0 : i32
    %c0_i32_0 = arith.constant 0 : i32
    %c0_i32_1 = arith.constant 0 : i32
    return %c0_i32, %c0_i32_0 : i32, i32
  }
  func.func @transform_5(%arg0: i32, %arg1: i32) -> (i32, i32) {
    %c0_i32 = arith.constant 0 : i32
    %c0_i32_0 = arith.constant 0 : i32
    %c0_i32_1 = arith.constant 0 : i32
    return %c0_i32, %c0_i32_0 : i32, i32
  }
  func.func @transform_6(%arg0: i32, %arg1: i32) -> (i32, i32) {
    %c0_i32 = arith.constant 0 : i32
    %c0_i32_0 = arith.constant 0 : i32
    %c0_i32_1 = arith.constant 0 : i32
    return %c0_i32, %c0_i32_0 : i32, i32
  }
  func.func @transform_7(%arg0: i32, %arg1: i32) -> (i32, i32) {
    %c0_i32 = arith.constant 0 : i32
    %c0_i32_0 = arith.constant 0 : i32
    %c0_i32_1 = arith.constant 0 : i32
    return %c0_i32, %c0_i32_0 : i32, i32
  }
  func.func @transform_8(%arg0: i32, %arg1: i32) -> (i32, i32, i32) {
    %c0_i32 = arith.constant 0 : i32
    %c0_i32_0 = arith.constant 0 : i32
    return %arg0, %c0_i32, %arg1 : i32, i32, i32
  }
}

</mosaic_0001>

<llo_original>
// kernel: tpu_custom_call.1
$region0: #{tpu_custom_call.1}
  #allocation0 [shape = 'u32[]', space=smem, size = 0x4, offset = 0x4, fixed_abs, tag = 'smem constant byte address 0x4 - core index']
  #allocation1 [shape = 'u32[144,128]{1,0:T(1,128)}', space=vmem, size = 0x12000, scoped, tag = 'internal scratch']
  #allocation2 [shape = 'f32[256,4]{1,0:T(8,128)}', space=vmem, size = 0x20000, scoped, tag = 'scratch operand']
  #allocation3 [shape = 'f32[64,4]{1,0:T(8,128)}', space=vmem, size = 0x8000, scoped, tag = 'scratch operand']
  #allocation4 [shape = 'f32[8,64]{1,0:T(8,128)}', space=vmem, size = 0x1000, scoped, tag = 'scratch operand']
  %s0 = inlined_call_operand.hbm [shape: f32[2,8,256], index: 0, kind: input, shape index: {}]
  %s1 = inlined_call_operand.vmem [shape: f32[4,8], index: 1, kind: input, shape index: {}]
  %s2 = inlined_call_operand.vmem [shape: f32[4,1], index: 2, kind: input, shape index: {}]
  %s3 = inlined_call_operand.vmem [shape: f32[4,8], index: 3, kind: input, shape index: {}]
  %s4 = inlined_call_operand.vmem [shape: f32[1,4], index: 4, kind: input, shape index: {}]
  %s5 = inlined_call_operand.vmem [shape: f32[4,8], index: 5, kind: input, shape index: {}]
  %s6 = inlined_call_operand.vmem [shape: f32[8,4], index: 6, kind: input, shape index: {}]
  %s7 = inlined_call_operand.vmem [shape: f32[8,1], index: 7, kind: input, shape index: {}]
  %s8 = inlined_call_operand.hbm [shape: f32[2,8,256], index: 8, kind: output, shape index: {}]
  %s9 = sld [smem:[#allocation0]]
  $region73: #{tpu_custom_call.1} parent=0
    _
  %s11 = ssub.s32 1, %s9
  %s12 = scalar_select 0, %s11, %s9
  $region1: #{tpu_custom_call.1} parent=0
    #allocation5 [shape = 'u8[16384]{0}', space=vmem, size = 0x4000, scoped, tag = 'input window, operand 0']
    #allocation6 [shape = 's32[2]{0}', space=sflag, size = 0x8, scoped, tag = 'scoped memory for tpu_custom_call.1']
    #allocation7 [shape = 's32[2]{0}', space=sflag, size = 0x8, scoped, tag = 'scoped memory for tpu_custom_call.1']
    #allocation8 [shape = 'u8[16384]{0}', space=vmem, size = 0x4000, scoped, tag = 'output window, operand 0']
    %13 = vsyncpa [#allocation6], 0
    %s14 = scalar_lea.sflag [#allocation6], 1
    %15 = vsyncpa %s14, 0
    %16 = vsyncpa [#allocation7], 0
    %s17 = scalar_lea.sflag [#allocation7], 1
    %18 = vsyncpa %s17, 0
    loop: start=0, step=1, limit=4
    $region2: #{tpu_custom_call.1} parent=1 // loop_pre_header
      _
    $region3: #{tpu_custom_call.1} parent=1 // loop_header
      %s20 = sphi 0, %s24
      %p21 = scmp.ge.s32.totalorder %s20, 4
      %s27 = sphi 0, %s39
      %s28 = sphi 0, %s35
      %s29 = sphi 0, %s27
      %s30 = sphi 0, %s28
      %s31 = sphi 0, %s29
      %s32 = sphi 0, %s30
      %s42 = sphi 0, %s44
      %s45 = sphi 0, %s42
      %s46 = sphi 0, %s45
      %s62 = sphi 0, %s46
      %s66 = sphi 0, %s66
      %s68 = sphi 0, %s66
      %s69 = sphi 0, %s68
      %s83 = sphi 0, %s69
      %s87 = sphi 0, %s87
      %s89 = sphi 0, %s87
      %s90 = sphi 0, %s89
      %s104 = sphi 0, %s90
      %s108 = sphi 0, %s108
      %s110 = sphi 0, %s108
      %s111 = sphi 0, %s110
      %s125 = sphi 0, %s111
      %s129 = sphi 0, %s129
      %s131 = sphi 0, %s129
      %s132 = sphi 0, %s131
      %s146 = sphi 0, %s132
      %s150 = sphi 0, %s150
      %s152 = sphi 0, %s150
      %s153 = sphi 0, %s152
      %s167 = sphi 0, %s153
      %s171 = sphi 0, %s171
      %s173 = sphi 0, %s171
      %s174 = sphi 0, %s173
      %s188 = sphi 0, %s174
      %s192 = sphi 0, %s192
      %s194 = sphi 0, %s192
      %s195 = sphi 0, %s194
      %s209 = sphi 0, %s195
      %s217 = sphi 0, %s219
      %s220 = sphi 0, %s217
      %s221 = sphi 0, %s220
      %s237 = sphi 0, %s221
    $region4: #{tpu_custom_call.1} parent=1 // loop_header_branch
      %23 = sbr.rel (%p21) target = $region8
    $region5: #{tpu_custom_call.1} parent=1 // loop_body
      %s25 = ssub.s32 %s20, 1
      %s26 = ssub.s32 %s20, 2
      %s33 = sadd.s32 1, %s28
      %p34 = scmp.ge.s32.totalorder %s33, 1
      %s35 = scalar_select %p34, 0, %s33
      %s36 = sadd.s32 1, %s27
      %s37 = scalar_select %p34, %s36, %s27
      %p38 = scmp.ge.s32.totalorder %s37, 2
      %s39 = scalar_select %p38, 0, %s37
      %s40 = ssub.s32 %s27, %s39
      %p41 = scmp.eq.s32.totalorder %s40, 0
      %s43 = sadd.s32 %s42, 1
      %s44 = scalar_select %p41, %s42, %s43
      %p47 = pneg %p41
      %p48 = scmp.eq.s32.totalorder %s20, 1
      %p49 = por %p47, %p48
      %p50 = scmp.ne.s32.totalorder %s42, %s45
      %p51 = scmp.eq.s32.totalorder %s20, 0
      %p52 = por %p50, %p51
      %p53 = scmp.ne.s32.totalorder %s42, %s45
      %p54 = scmp.eq.s32.totalorder %s25, 1
      %p55 = por %p53, %p54
      %p56 = scmp.ne.s32.totalorder %s45, %s46
      %p57 = scmp.eq.s32.totalorder %s25, 0
      %p58 = por %p56, %p57
      %p59 = scmp.ne.s32.totalorder %s45, %s46
      %p60 = scmp.eq.s32.totalorder %s26, 1
      %p61 = por %p59, %p60
      %p63 = scmp.ne.s32.totalorder %s46, %s62
      %p64 = scmp.eq.s32.totalorder %s26, 0
      %p65 = por %p63, %p64
      %s67 = sadd.s32 %s66, 1
      %p70 = scmp.eq.s32.totalorder %s20, 1
      %p71 = scmp.ne.s32.totalorder %s66, %s68
      %p72 = scmp.eq.s32.totalorder %s20, 0
      %p73 = por %p71, %p72
      %p74 = scmp.ne.s32.totalorder %s66, %s68
      %p75 = scmp.eq.s32.totalorder %s25, 1
      %p76 = por %p74, %p75
      %p77 = scmp.ne.s32.totalorder %s68, %s69
      %p78 = scmp.eq.s32.totalorder %s25, 0
      %p79 = por %p77, %p78
      %p80 = scmp.ne.s32.totalorder %s68, %s69
      %p81 = scmp.eq.s32.totalorder %s26, 1
      %p82 = por %p80, %p81
      %p84 = scmp.ne.s32.totalorder %s69, %s83
      %p85 = scmp.eq.s32.totalorder %s26, 0
      %p86 = por %p84, %p85
      %s88 = sadd.s32 %s87, 1
      %p91 = scmp.eq.s32.totalorder %s20, 1
      %p92 = scmp.ne.s32.totalorder %s87, %s89
      %p93 = scmp.eq.s32.totalorder %s20, 0
      %p94 = por %p92, %p93
      %p95 = scmp.ne.s32.totalorder %s87, %s89
      %p96 = scmp.eq.s32.totalorder %s25, 1
      %p97 = por %p95, %p96
      %p98 = scmp.ne.s32.totalorder %s89, %s90
      %p99 = scmp.eq.s32.totalorder %s25, 0
      %p100 = por %p98, %p99
      %p101 = scmp.ne.s32.totalorder %s89, %s90
      %p102 = scmp.eq.s32.totalorder %s26, 1
      %p103 = por %p101, %p102
      %p105 = scmp.ne.s32.totalorder %s90, %s104
      %p106 = scmp.eq.s32.totalorder %s26, 0
      %p107 = por %p105, %p106
      %s109 = sadd.s32 %s108, 1
      %p112 = scmp.eq.s32.totalorder %s20, 1
      %p113 = scmp.ne.s32.totalorder %s108, %s110
      %p114 = scmp.eq.s32.totalorder %s20, 0
      %p115 = por %p113, %p114
      %p116 = scmp.ne.s32.totalorder %s108, %s110
      %p117 = scmp.eq.s32.totalorder %s25, 1
      %p118 = por %p116, %p117
      %p119 = scmp.ne.s32.totalorder %s110, %s111
      %p120 = scmp.eq.s32.totalorder %s25, 0
      %p121 = por %p119, %p120
      %p122 = scmp.ne.s32.totalorder %s110, %s111
      %p123 = scmp.eq.s32.totalorder %s26, 1
      %p124 = por %p122, %p123
      %p126 = scmp.ne.s32.totalorder %s111, %s125
      %p127 = scmp.eq.s32.totalorder %s26, 0
      %p128 = por %p126, %p127
      %s130 = sadd.s32 %s129, 1
      %p133 = scmp.eq.s32.totalorder %s20, 1
      %p134 = scmp.ne.s32.totalorder %s129, %s131
      %p135 = scmp.eq.s32.totalorder %s20, 0
      %p136 = por %p134, %p135
      %p137 = scmp.ne.s32.totalorder %s129, %s131
      %p138 = scmp.eq.s32.totalorder %s25, 1
      %p139 = por %p137, %p138
      %p140 = scmp.ne.s32.totalorder %s131, %s132
      %p141 = scmp.eq.s32.totalorder %s25, 0
      %p142 = por %p140, %p141
      %p143 = scmp.ne.s32.totalorder %s131, %s132
      %p144 = scmp.eq.s32.totalorder %s26, 1
      %p145 = por %p143, %p144
      %p147 = scmp.ne.s32.totalorder %s132, %s146
      %p148 = scmp.eq.s32.totalorder %s26, 0
      %p149 = por %p147, %p148
      %s151 = sadd.s32 %s150, 1
      %p154 = scmp.eq.s32.totalorder %s20, 1
      %p155 = scmp.ne.s32.totalorder %s150, %s152
      %p156 = scmp.eq.s32.totalorder %s20, 0
      %p157 = por %p155, %p156
      %p158 = scmp.ne.s32.totalorder %s150, %s152
      %p159 = scmp.eq.s32.totalorder %s25, 1
      %p160 = por %p158, %p159
      %p161 = scmp.ne.s32.totalorder %s152, %s153
      %p162 = scmp.eq.s32.totalorder %s25, 0
      %p163 = por %p161, %p162
      %p164 = scmp.ne.s32.totalorder %s152, %s153
      %p165 = scmp.eq.s32.totalorder %s26, 1
      %p166 = por %p164, %p165
      %p168 = scmp.ne.s32.totalorder %s153, %s167
      %p169 = scmp.eq.s32.totalorder %s26, 0
      %p170 = por %p168, %p169
      %s172 = sadd.s32 %s171, 1
      %p175 = scmp.eq.s32.totalorder %s20, 1
      %p176 = scmp.ne.s32.totalorder %s171, %s173
      %p177 = scmp.eq.s32.totalorder %s20, 0
      %p178 = por %p176, %p177
      %p179 = scmp.ne.s32.totalorder %s171, %s173
      %p180 = scmp.eq.s32.totalorder %s25, 1
      %p181 = por %p179, %p180
      %p182 = scmp.ne.s32.totalorder %s173, %s174
      %p183 = scmp.eq.s32.totalorder %s25, 0
      %p184 = por %p182, %p183
      %p185 = scmp.ne.s32.totalorder %s173, %s174
      %p186 = scmp.eq.s32.totalorder %s26, 1
      %p187 = por %p185, %p186
      %p189 = scmp.ne.s32.totalorder %s174, %s188
      %p190 = scmp.eq.s32.totalorder %s26, 0
      %p191 = por %p189, %p190
      %s193 = sadd.s32 %s192, 1
      %p196 = scmp.eq.s32.totalorder %s20, 1
      %p197 = scmp.ne.s32.totalorder %s192, %s194
      %p198 = scmp.eq.s32.totalorder %s20, 0
      %p199 = por %p197, %p198
      %p200 = scmp.ne.s32.totalorder %s192, %s194
      %p201 = scmp.eq.s32.totalorder %s25, 1
      %p202 = por %p200, %p201
      %p203 = scmp.ne.s32.totalorder %s194, %s195
      %p204 = scmp.eq.s32.totalorder %s25, 0
      %p205 = por %p203, %p204
      %p206 = scmp.ne.s32.totalorder %s194, %s195
      %p207 = scmp.eq.s32.totalorder %s26, 1
      %p208 = por %p206, %p207
      %p210 = scmp.ne.s32.totalorder %s195, %s209
      %p211 = scmp.eq.s32.totalorder %s26, 0
      %p212 = por %p210, %p211
      %s213 = ssub.s32 %s27, %s39
      %s214 = ssub.s32 %s28, %s35
      %s215 = sor.u32 %s213, %s214
      %p216 = scmp.eq.s32.totalorder %s215, 0
      %s218 = sadd.s32 %s217, 1
      %s219 = scalar_select %p216, %s217, %s218
      %p222 = pneg %p216
      %p223 = scmp.eq.s32.totalorder %s20, 1
      %p224 = por %p222, %p223
      %p225 = scmp.ne.s32.totalorder %s217, %s220
      %p226 = scmp.eq.s32.totalorder %s20, 0
      %p227 = por %p225, %p226
      %p228 = scmp.ne.s32.totalorder %s217, %s220
      %p229 = scmp.eq.s32.totalorder %s25, 1
      %p230 = por %p228, %p229
      %p231 = scmp.ne.s32.totalorder %s220, %s221
      %p232 = scmp.eq.s32.totalorder %s25, 0
      %p233 = por %p231, %p232
      %p234 = scmp.ne.s32.totalorder %s220, %s221
      %p235 = scmp.eq.s32.totalorder %s26, 1
      %p236 = por %p234, %p235
      %p238 = scmp.ne.s32.totalorder %s221, %s237
      %p239 = scmp.eq.s32.totalorder %s26, 0
      %p240 = por %p238, %p239
      %p241 = scmp.le.s32.totalorder 1, %s20
      %p242 = scmp.lt.s32.totalorder %s20, 3
      %p243 = pnand %p241, %p242
      %p244 = pneg %p243
      // Predicated region
      $region9: #{tpu_custom_call.1} parent=5 // pred_check
        _
      $region10: #{tpu_custom_call.1} parent=5 // pred_check_branch
        %246 = sbr.rel (%p243) target = $region12
      $region11: #{tpu_custom_call.1} parent=5 // pred_region
        %s247 = ssub.s32 %s20, 1
        // Predicated region
        $region13: #{tpu_custom_call.1} parent=11 // pred_check
          %p248 = pneg %p79
        $region14: #{tpu_custom_call.1} parent=11 // pred_check_branch
          %250 = sbr.rel (%p248) target = $region16
        $region15: #{tpu_custom_call.1} parent=11 // pred_region
          _
        $region16: #{tpu_custom_call.1} parent=11 // pred_fallthru
          _
        // Predicated region
        $region17: #{tpu_custom_call.1} parent=11 // pred_check
          %p251 = pneg %p100
        $region18: #{tpu_custom_call.1} parent=11 // pred_check_branch
          %253 = sbr.rel (%p251) target = $region20
        $region19: #{tpu_custom_call.1} parent=11 // pred_region
          _
        $region20: #{tpu_custom_call.1} parent=11 // pred_fallthru
          _
        // Predicated region
        $region21: #{tpu_custom_call.1} parent=11 // pred_check
          %p254 = pneg %p121
        $region22: #{tpu_custom_call.1} parent=11 // pred_check_branch
          %256 = sbr.rel (%p254) target = $region24
        $region23: #{tpu_custom_call.1} parent=11 // pred_region
          _
        $region24: #{tpu_custom_call.1} parent=11 // pred_fallthru
          _
        // Predicated region
        $region25: #{tpu_custom_call.1} parent=11 // pred_check
          %p257 = pneg %p142
        $region26: #{tpu_custom_call.1} parent=11 // pred_check_branch
          %259 = sbr.rel (%p257) target = $region28
        $region27: #{tpu_custom_call.1} parent=11 // pred_region
          _
        $region28: #{tpu_custom_call.1} parent=11 // pred_fallthru
          _
        // Predicated region
        $region29: #{tpu_custom_call.1} parent=11 // pred_check
          %p260 = pneg %p163
        $region30: #{tpu_custom_call.1} parent=11 // pred_check_branch
          %262 = sbr.rel (%p260) target = $region32
        $region31: #{tpu_custom_call.1} parent=11 // pred_region
          _
        $region32: #{tpu_custom_call.1} parent=11 // pred_fallthru
          _
        // Predicated region
        $region33: #{tpu_custom_call.1} parent=11 // pred_check
          %p263 = pneg %p184
        $region34: #{tpu_custom_call.1} parent=11 // pred_check_branch
          %265 = sbr.rel (%p263) target = $region36
        $region35: #{tpu_custom_call.1} parent=11 // pred_region
          _
        $region36: #{tpu_custom_call.1} parent=11 // pred_fallthru
          _
        // Predicated region
        $region37: #{tpu_custom_call.1} parent=11 // pred_check
          %p266 = pneg %p205
        $region38: #{tpu_custom_call.1} parent=11 // pred_check_branch
          %268 = sbr.rel (%p266) target = $region40
        $region39: #{tpu_custom_call.1} parent=11 // pred_region
          _
        $region40: #{tpu_custom_call.1} parent=11 // pred_fallthru
          _
      $region12: #{tpu_custom_call.1} parent=5 // pred_fallthru
        _
      %p269 = scmp.lt.s32.totalorder %s20, 2
      // Predicated region
      $region41: #{tpu_custom_call.1} parent=5 // pred_check
        %p270 = pneg %p269
      $region42: #{tpu_custom_call.1} parent=5 // pred_check_branch
        %272 = sbr.rel (%p270) target = $region44
      $region43: #{tpu_custom_call.1} parent=5 // pred_region
        // Predicated region
        $region45: #{tpu_custom_call.1} parent=43 // pred_check
          %p273 = pneg %p52
        $region46: #{tpu_custom_call.1} parent=43 // pred_check_branch
          %275 = sbr.rel (%p273) target = $region48
        $region47: #{tpu_custom_call.1} parent=43 // pred_region
          %s276 = sand.u32 %s42, 1
          %s277 = scalar_lea.sflag [#allocation6], %s276
          %s278 = sand.u32 %s42, 1
          %s279 = smul.addr %s278, 16
          %s280 = scalar_lea.vmem [#allocation5], %s279
          %s282 = ssub.s32 256, 256
          %283 = vsyncadd %s277, %s282
          %s284 = smul.addr %s27, 2
          %s285 = smul.addr %s284, 128
          %s286 = scalar_lea.hbm %s0, %s285
          %s288 = sshll.u32 %s280, 4
          %s289 = int_to_ptr.vmem [resolvable:$true] %s288
          %291 = dma.hbm_to_vmem [thread:$0]  %s286, 256, %s289, %s277
        $region48: #{tpu_custom_call.1} parent=43 // pred_fallthru
          _
      $region44: #{tpu_custom_call.1} parent=5 // pred_fallthru
        _
      %p292 = scmp.le.s32.totalorder 1, %s20
      %p293 = scmp.lt.s32.totalorder %s20, 3
      %p294 = pnand %p292, %p293
      %p295 = pneg %p294
      // Predicated region
      $region49: #{tpu_custom_call.1} parent=5 // pred_check
        _
      $region50: #{tpu_custom_call.1} parent=5 // pred_check_branch
        %297 = sbr.rel (%p294) target = $region52
      $region51: #{tpu_custom_call.1} parent=5 // pred_region
        %s298 = ssub.s32 %s20, 1
        %s299 = sand.u32 %s45, 1
        %s300 = scalar_lea.sflag [#allocation6], %s299
        %s301 = sand.u32 %s45, 1
        %s302 = smul.addr %s301, 16
        %s303 = scalar_lea.vmem [#allocation5], %s302
        // Predicated region
        $region53: #{tpu_custom_call.1} parent=51 // pred_check
          %p304 = pneg %p58
        $region54: #{tpu_custom_call.1} parent=51 // pred_check_branch
          %306 = sbr.rel (%p304) target = $region56
        $region55: #{tpu_custom_call.1} parent=51 // pred_region
          %307 = dma.done %s300, 256
        $region56: #{tpu_custom_call.1} parent=51 // pred_fallthru
          _
        %s308 = sand.u32 %s45, 1
        %s309 = scalar_lea.sflag [#allocation6], %s308
        %s310 = sand.u32 %s45, 1
        %s311 = smul.addr %s310, 16
        %s312 = scalar_lea.vmem [#allocation5], %s311
        %p313 = pneg %p58
        %p314 = pneg %p55
        %p315 = pneg %p79
        %p316 = pneg %p76
        %p317 = pneg %p100
        %p318 = pneg %p97
        %p319 = pneg %p121
        %p320 = pneg %p118
        %p321 = pneg %p142
        %p322 = pneg %p139
        %p323 = pneg %p163
        %p324 = pneg %p160
        %p325 = pneg %p184
        %p326 = pneg %p181
        %p327 = pneg %p205
        %p328 = pneg %p202
        %p329 = pneg %p233
        %p330 = pneg %p230
        %s331 = sand.u32 %s220, 1
        %s332 = scalar_lea.sflag [#allocation7], %s331
        %s333 = sand.u32 %s220, 1
        %s334 = smul.addr %s333, 16
        %s335 = scalar_lea.vmem [#allocation8], %s334
        %s336 = smul.u32 2, %s30
        %p337 = scmp.eq.s32.totalorder %s30, 0
        // Predicated region
        $region57: #{tpu_custom_call.1} parent=51 // pred_check
          %p338 = pneg %p337
        $region58: #{tpu_custom_call.1} parent=51 // pred_check_branch
          %340 = sbr.rel (%p338) target = $region60
        $region59: #{tpu_custom_call.1} parent=51 // pred_region
          %v341 = vld [vmem:[%s303] sm:$0xff]
          %v342 = vld [vmem:[%s303 + $0x8] sm:$0xff]
          %v343 = vld [vmem:[%s3] sm:$0xf]
          %344 = vxpose.xlu0.b32.start [1/16] %v341, 128
          %345 = vxpose.xlu0.b32.cont [2/16] 0.0, 128
          %346 = vxpose.xlu0.b32.cont [3/16] 0.0, 128
          %347 = vxpose.xlu0.b32.cont [4/16] 0.0, 128
          %348 = vxpose.xlu0.b32.cont [5/16] 0.0, 128
          %349 = vxpose.xlu0.b32.cont [6/16] 0.0, 128
          %350 = vxpose.xlu0.b32.cont [7/16] 0.0, 128
          %351 = vxpose.xlu0.b32.cont [8/16] 0.0, 128
          %352 = vxpose.xlu0.b32.cont [9/16] 0.0, 128
          %353 = vxpose.xlu0.b32.cont [10/16] 0.0, 128
          %354 = vxpose.xlu0.b32.cont [11/16] 0.0, 128
          %355 = vxpose.xlu0.b32.cont [12/16] 0.0, 128
          %356 = vxpose.xlu0.b32.cont [13/16] 0.0, 128
          %357 = vxpose.xlu0.b32.cont [14/16] 0.0, 128
          %358 = vxpose.xlu0.b32.cont [15/16] 0.0, 128
          %359 = vxpose.xlu0.b32.end [16/16] 0.0, 128
          %v360 = vpop.trf.xlu0
          %v361 = vpop.trf.xlu0
          %v362 = vpop.trf.xlu0
          %v363 = vpop.trf.xlu0
          %v364 = vpop.trf.xlu0
          %v365 = vpop.trf.xlu0
          %v366 = vpop.trf.xlu0
          %v367 = vpop.trf.xlu0
          %v368 = vpop.trf.xlu0
          %v369 = vpop.trf.xlu0
          %v370 = vpop.trf.xlu0
          %v371 = vpop.trf.xlu0
          %v372 = vpop.trf.xlu0
          %v373 = vpop.trf.xlu0
          %v374 = vpop.trf.xlu0
          %v375 = vpop.trf.xlu0
          %376 = vxpose.xlu0.b32.start [1/16] %v342, 128
          %377 = vxpose.xlu0.b32.cont [2/16] 0.0, 128
          %378 = vxpose.xlu0.b32.cont [3/16] 0.0, 128
          %379 = vxpose.xlu0.b32.cont [4/16] 0.0, 128
          %380 = vxpose.xlu0.b32.cont [5/16] 0.0, 128
          %381 = vxpose.xlu0.b32.cont [6/16] 0.0, 128
          %382 = vxpose.xlu0.b32.cont [7/16] 0.0, 128
          %383 = vxpose.xlu0.b32.cont [8/16] 0.0, 128
          %384 = vxpose.xlu0.b32.cont [9/16] 0.0, 128
          %385 = vxpose.xlu0.b32.cont [10/16] 0.0, 128
          %386 = vxpose.xlu0.b32.cont [11/16] 0.0, 128
          %387 = vxpose.xlu0.b32.cont [12/16] 0.0, 128
          %388 = vxpose.xlu0.b32.cont [13/16] 0.0, 128
          %389 = vxpose.xlu0.b32.cont [14/16] 0.0, 128
          %390 = vxpose.xlu0.b32.cont [15/16] 0.0, 128
          %391 = vxpose.xlu0.b32.end [16/16] 0.0, 128
          %v392 = vpop.trf.xlu0
          %v393 = vpop.trf.xlu0
          %v394 = vpop.trf.xlu0
          %v395 = vpop.trf.xlu0
          %v396 = vpop.trf.xlu0
          %v397 = vpop.trf.xlu0
          %v398 = vpop.trf.xlu0
          %v399 = vpop.trf.xlu0
          %v400 = vpop.trf.xlu0
          %v401 = vpop.trf.xlu0
          %v402 = vpop.trf.xlu0
          %v403 = vpop.trf.xlu0
          %v404 = vpop.trf.xlu0
          %v405 = vpop.trf.xlu0
          %v406 = vpop.trf.xlu0
          %v407 = vpop.trf.xlu0
          %vm408 = vcmask 64512
          %v410 = vsel %vm408, %v360, 0
          %v413 = vsel %vm408, %v361, 0
          %v416 = vsel %vm408, %v362, 0
          %v419 = vsel %vm408, %v363, 0
          %v422 = vsel %vm408, %v364, 0
          %v425 = vsel %vm408, %v365, 0
          %v428 = vsel %vm408, %v366, 0
          %v431 = vsel %vm408, %v367, 0
          %v434 = vsel %vm408, %v368, 0
          %v437 = vsel %vm408, %v369, 0
          %v440 = vsel %vm408, %v370, 0
          %v443 = vsel %vm408, %v371, 0
          %v446 = vsel %vm408, %v372, 0
          %v449 = vsel %vm408, %v373, 0
          %v452 = vsel %vm408, %v374, 0
          %v455 = vsel %vm408, %v375, 0
          %v458 = vsel %vm408, %v392, 0
          %v461 = vsel %vm408, %v393, 0
          %v464 = vsel %vm408, %v394, 0
          %v467 = vsel %vm408, %v395, 0
          %v470 = vsel %vm408, %v396, 0
          %v473 = vsel %vm408, %v397, 0
          %v476 = vsel %vm408, %v398, 0
          %v479 = vsel %vm408, %v399, 0
          %v482 = vsel %vm408, %v400, 0
          %v485 = vsel %vm408, %v401, 0
          %v488 = vsel %vm408, %v402, 0
          %v491 = vsel %vm408, %v403, 0
          %v494 = vsel %vm408, %v404, 0
          %v497 = vsel %vm408, %v405, 0
          %v500 = vsel %vm408, %v406, 0
          %v503 = vsel %vm408, %v407, 0
          %v506 = vsel %vm408, %v343, 0
          %508 = vmatprep.subr.mxu0 0.0
          %509 = vmatpush1.xpose.msra.mxu0 %v506
          %510 = vmatprep.subr.mxu0 0.0
          %511 = vmatpush1.xpose.msra.mxu0 0.0
          %512 = vmatprep.subr.mxu0 0.0
          %513 = vmatpush1.xpose.msra.mxu0 0.0
          %514 = vmatprep.subr.mxu0 0.0
          %515 = vmatpush1.xpose.msra.mxu0 0.0
          %516 = vmatprep.subr.mxu0 0.0
          %517 = vmatpush1.xpose.msra.mxu0 0.0
          %518 = vmatprep.subr.mxu0 0.0
          %519 = vmatpush1.xpose.msra.mxu0 0.0
          %520 = vmatprep.subr.mxu0 0.0
          %521 = vmatpush1.xpose.msra.mxu0 0.0
          %522 = vmatprep.subr.mxu0 0.0
          %523 = vmatpush1.xpose.msra.mxu0 0.0
          %524 = vmatprep.subr.mxu0 0.0
          %525 = vmatpush1.xpose.msra.mxu0 0.0
          %526 = vmatprep.subr.mxu0 0.0
          %527 = vmatpush1.xpose.msra.mxu0 0.0
          %528 = vmatprep.subr.mxu0 0.0
          %529 = vmatpush1.xpose.msra.mxu0 0.0
          %530 = vmatprep.subr.mxu0 0.0
          %531 = vmatpush1.xpose.msra.mxu0 0.0
          %532 = vmatprep.subr.mxu0 0.0
          %533 = vmatpush1.xpose.msra.mxu0 0.0
          %534 = vmatprep.subr.mxu0 0.0
          %535 = vmatpush1.xpose.msra.mxu0 0.0
          %536 = vmatprep.subr.mxu0 0.0
          %537 = vmatpush1.xpose.msra.mxu0 0.0
          %538 = vmatprep.subr.mxu0 0.0
          %539 = vmatpush1.xpose.msra.mxu0 0.0
          %540 = vmatprep.subr.mxu0 0.0
          %541 = vmatpush1.xpose.msra.mxu0 0.0
          %542 = vmatprep.subr.mxu0 0.0
          %543 = vmatpush1.xpose.msra.mxu0 0.0
          %544 = vmatprep.subr.mxu0 0.0
          %545 = vmatpush1.xpose.msra.mxu0 0.0
          %546 = vmatprep.subr.mxu0 0.0
          %547 = vmatpush1.xpose.msra.mxu0 0.0
          %548 = vmatprep.subr.mxu0 0.0
          %549 = vmatpush1.xpose.msra.mxu0 0.0
          %550 = vmatprep.subr.mxu0 0.0
          %551 = vmatpush1.xpose.msra.mxu0 0.0
          %552 = vmatprep.subr.mxu0 0.0
          %553 = vmatpush1.xpose.msra.mxu0 0.0
          %554 = vmatprep.subr.mxu0 0.0
          %555 = vmatpush1.xpose.msra.mxu0 0.0
          %556 = vmatprep.subr.mxu0 0.0
          %557 = vmatpush1.xpose.msra.mxu0 0.0
          %558 = vmatprep.subr.mxu0 0.0
          %559 = vmatpush1.xpose.msra.mxu0 0.0
          %560 = vmatprep.subr.mxu0 0.0
          %561 = vmatpush1.xpose.msra.mxu0 0.0
          %562 = vmatprep.subr.mxu0 0.0
          %563 = vmatpush1.xpose.msra.mxu0 0.0
          %564 = vmatprep.subr.mxu0 0.0
          %565 = vmatpush1.xpose.msra.mxu0 0.0
          %566 = vmatprep.subr.mxu0 0.0
          %567 = vmatpush1.xpose.msra.mxu0 0.0
          %568 = vmatprep.subr.mxu0 0.0
          %569 = vmatpush1.xpose.msra.mxu0 0.0
          %570 = vmatprep.subr.mxu0 0.0
          %571 = vmatpush1.xpose.msra.mxu0 0.0
          %572 = vmatprep.mubr.f32.mxu0 0.0
          %573 = vmatmul.mubr.f32.gmra.mrb[0].mxu0 %v410
          %v574 = vpop.f32.mrb[0].mxu0
          %v575 = vadd.f32 0.0, %v574
          %v576 = vpop.f32.mrb[0].mxu0
          %577 = vmatprep.mubr.f32.mxu0 0.0
          %578 = vmatmul.mubr.f32.gmra.mrb[0].mxu0 %v413
          %v579 = vpop.f32.mrb[0].mxu0
          %v580 = vadd.f32 0.0, %v579
          %v581 = vpop.f32.mrb[0].mxu0
          %582 = vmatprep.mubr.f32.mxu0 0.0
          %583 = vmatmul.mubr.f32.gmra.mrb[0].mxu0 %v416
          %v584 = vpop.f32.mrb[0].mxu0
          %v585 = vadd.f32 0.0, %v584
          %v586 = vpop.f32.mrb[0].mxu0
          %587 = vmatprep.mubr.f32.mxu0 0.0
          %588 = vmatmul.mubr.f32.gmra.mrb[0].mxu0 %v419
          %v589 = vpop.f32.mrb[0].mxu0
          %v590 = vadd.f32 0.0, %v589
          %v591 = vpop.f32.mrb[0].mxu0
          %592 = vmatprep.mubr.f32.mxu0 0.0
          %593 = vmatmul.mubr.f32.gmra.mrb[0].mxu0 %v422
          %v594 = vpop.f32.mrb[0].mxu0
          %v595 = vadd.f32 0.0, %v594
          %v596 = vpop.f32.mrb[0].mxu0
          %597 = vmatprep.mubr.f32.mxu0 0.0
          %598 = vmatmul.mubr.f32.gmra.mrb[0].mxu0 %v425
          %v599 = vpop.f32.mrb[0].mxu0
          %v600 = vadd.f32 0.0, %v599
          %v601 = vpop.f32.mrb[0].mxu0
          %602 = vmatprep.mubr.f32.mxu0 0.0
          %603 = vmatmul.mubr.f32.gmra.mrb[0].mxu0 %v428
          %v604 = vpop.f32.mrb[0].mxu0
          %v605 = vadd.f32 0.0, %v604
          %v606 = vpop.f32.mrb[0].mxu0
          %607 = vmatprep.mubr.f32.mxu0 0.0
          %608 = vmatmul.mubr.f32.gmra.mrb[0].mxu0 %v431
          %v609 = vpop.f32.mrb[0].mxu0
          %v610 = vadd.f32 0.0, %v609
          %v611 = vpop.f32.mrb[0].mxu0
          %612 = vmatprep.mubr.f32.mxu0 0.0
          %613 = vmatmul.mubr.f32.gmra.mrb[0].mxu0 %v434
          %v614 = vpop.f32.mrb[0].mxu0
          %v615 = vadd.f32 0.0, %v614
          %v616 = vpop.f32.mrb[0].mxu0
          %617 = vmatprep.mubr.f32.mxu0 0.0
          %618 = vmatmul.mubr.f32.gmra.mrb[0].mxu0 %v437
          %v619 = vpop.f32.mrb[0].mxu0
          %v620 = vadd.f32 0.0, %v619
          %v621 = vpop.f32.mrb[0].mxu0
          %622 = vmatprep.mubr.f32.mxu0 0.0
          %623 = vmatmul.mubr.f32.gmra.mrb[0].mxu0 %v440
          %v624 = vpop.f32.mrb[0].mxu0
          %v625 = vadd.f32 0.0, %v624
          %v626 = vpop.f32.mrb[0].mxu0
          %627 = vmatprep.mubr.f32.mxu0 0.0
          %628 = vmatmul.mubr.f32.gmra.mrb[0].mxu0 %v443
          %v629 = vpop.f32.mrb[0].mxu0
          %v630 = vadd.f32 0.0, %v629
          %v631 = vpop.f32.mrb[0].mxu0
          %632 = vmatprep.mubr.f32.mxu0 0.0
          %633 = vmatmul.mubr.f32.gmra.mrb[0].mxu0 %v446
          %v634 = vpop.f32.mrb[0].mxu0
          %v635 = vadd.f32 0.0, %v634
          %v636 = vpop.f32.mrb[0].mxu0
          %637 = vmatprep.mubr.f32.mxu0 0.0
          %638 = vmatmul.mubr.f32.gmra.mrb[0].mxu0 %v449
          %v639 = vpop.f32.mrb[0].mxu0
          %v640 = vadd.f32 0.0, %v639
          %v641 = vpop.f32.mrb[0].mxu0
          %642 = vmatprep.mubr.f32.mxu0 0.0
          %643 = vmatmul.mubr.f32.gmra.mrb[0].mxu0 %v452
          %v644 = vpop.f32.mrb[0].mxu0
          %v645 = vadd.f32 0.0, %v644
          %v646 = vpop.f32.mrb[0].mxu0
          %647 = vmatprep.mubr.f32.mxu0 0.0
          %648 = vmatmul.mubr.f32.gmra.mrb[0].mxu0 %v455
          %v649 = vpop.f32.mrb[0].mxu0
          %v650 = vadd.f32 0.0, %v649
          %v651 = vpop.f32.mrb[0].mxu0
          %652 = vmatprep.mubr.f32.mxu0 0.0
          %653 = vmatmul.mubr.f32.gmra.mrb[0].mxu0 %v458
          %v654 = vpop.f32.mrb[0].mxu0
          %v655 = vadd.f32 0.0, %v654
          %v656 = vpop.f32.mrb[0].mxu0
          %657 = vmatprep.mubr.f32.mxu0 0.0
          %658 = vmatmul.mubr.f32.gmra.mrb[0].mxu0 %v461
          %v659 = vpop.f32.mrb[0].mxu0
          %v660 = vadd.f32 0.0, %v659
          %v661 = vpop.f32.mrb[0].mxu0
          %662 = vmatprep.mubr.f32.mxu0 0.0
          %663 = vmatmul.mubr.f32.gmra.mrb[0].mxu0 %v464
          %v664 = vpop.f32.mrb[0].mxu0
          %v665 = vadd.f32 0.0, %v664
          %v666 = vpop.f32.mrb[0].mxu0
          %667 = vmatprep.mubr.f32.mxu0 0.0
          %668 = vmatmul.mubr.f32.gmra.mrb[0].mxu0 %v467
          %v669 = vpop.f32.mrb[0].mxu0
          %v670 = vadd.f32 0.0, %v669
          %v671 = vpop.f32.mrb[0].mxu0
          %672 = vmatprep.mubr.f32.mxu0 0.0
          %673 = vmatmul.mubr.f32.gmra.mrb[0].mxu0 %v470
          %v674 = vpop.f32.mrb[0].mxu0
          %v675 = vadd.f32 0.0, %v674
          %v676 = vpop.f32.mrb[0].mxu0
          %677 = vmatprep.mubr.f32.mxu0 0.0
          %678 = vmatmul.mubr.f32.gmra.mrb[0].mxu0 %v473
          %v679 = vpop.f32.mrb[0].mxu0
          %v680 = vadd.f32 0.0, %v679
          %v681 = vpop.f32.mrb[0].mxu0
          %682 = vmatprep.mubr.f32.mxu0 0.0
          %683 = vmatmul.mubr.f32.gmra.mrb[0].mxu0 %v476
          %v684 = vpop.f32.mrb[0].mxu0
          %v685 = vadd.f32 0.0, %v684
          %v686 = vpop.f32.mrb[0].mxu0
          %687 = vmatprep.mubr.f32.mxu0 0.0
          %688 = vmatmul.mubr.f32.gmra.mrb[0].mxu0 %v479
          %v689 = vpop.f32.mrb[0].mxu0
          %v690 = vadd.f32 0.0, %v689
          %v691 = vpop.f32.mrb[0].mxu0
          %692 = vmatprep.mubr.f32.mxu0 0.0
          %693 = vmatmul.mubr.f32.gmra.mrb[0].mxu0 %v482
          %v694 = vpop.f32.mrb[0].mxu0
          %v695 = vadd.f32 0.0, %v694
          %v696 = vpop.f32.mrb[0].mxu0
          %697 = vmatprep.mubr.f32.mxu0 0.0
          %698 = vmatmul.mubr.f32.gmra.mrb[0].mxu0 %v485
          %v699 = vpop.f32.mrb[0].mxu0
          %v700 = vadd.f32 0.0, %v699
          %v701 = vpop.f32.mrb[0].mxu0
          %702 = vmatprep.mubr.f32.mxu0 0.0
          %703 = vmatmul.mubr.f32.gmra.mrb[0].mxu0 %v488
          %v704 = vpop.f32.mrb[0].mxu0
          %v705 = vadd.f32 0.0, %v704
          %v706 = vpop.f32.mrb[0].mxu0
          %707 = vmatprep.mubr.f32.mxu0 0.0
          %708 = vmatmul.mubr.f32.gmra.mrb[0].mxu0 %v491
          %v709 = vpop.f32.mrb[0].mxu0
          %v710 = vadd.f32 0.0, %v709
          %v711 = vpop.f32.mrb[0].mxu0
          %712 = vmatprep.mubr.f32.mxu0 0.0
          %713 = vmatmul.mubr.f32.gmra.mrb[0].mxu0 %v494
          %v714 = vpop.f32.mrb[0].mxu0
          %v715 = vadd.f32 0.0, %v714
          %v716 = vpop.f32.mrb[0].mxu0
          %717 = vmatprep.mubr.f32.mxu0 0.0
          %718 = vmatmul.mubr.f32.gmra.mrb[0].mxu0 %v497
          %v719 = vpop.f32.mrb[0].mxu0
          %v720 = vadd.f32 0.0, %v719
          %v721 = vpop.f32.mrb[0].mxu0
          %722 = vmatprep.mubr.f32.mxu0 0.0
          %723 = vmatmul.mubr.f32.gmra.mrb[0].mxu0 %v500
          %v724 = vpop.f32.mrb[0].mxu0
          %v725 = vadd.f32 0.0, %v724
          %v726 = vpop.f32.mrb[0].mxu0
          %727 = vmatprep.mubr.f32.mxu0 0.0
          %728 = vmatmul.mubr.f32.gmra.mrb[0].mxu0 %v503
          %v729 = vpop.f32.mrb[0].mxu0
          %v730 = vadd.f32 0.0, %v729
          %v731 = vpop.f32.mrb[0].mxu0
          %732 = vdwg.mxu0
          %vm733 = vcmask 31744
          %734 = vst.msk [vmem:[#allocation2] sm:$0xff] %vm733, %v575
          %735 = vst.msk [vmem:[#allocation2 + $0x8] sm:$0xff] %vm733, %v580
          %736 = vst.msk [vmem:[#allocation2 + $0x10] sm:$0xff] %vm733, %v585
          %737 = vst.msk [vmem:[#allocation2 + $0x18] sm:$0xff] %vm733, %v590
          %738 = vst.msk [vmem:[#allocation2 + $0x20] sm:$0xff] %vm733, %v595
          %739 = vst.msk [vmem:[#allocation2 + $0x28] sm:$0xff] %vm733, %v600
          %740 = vst.msk [vmem:[#allocation2 + $0x30] sm:$0xff] %vm733, %v605
          %741 = vst.msk [vmem:[#allocation2 + $0x38] sm:$0xff] %vm733, %v610
          %742 = vst.msk [vmem:[#allocation2 + $0x40] sm:$0xff] %vm733, %v615
          %743 = vst.msk [vmem:[#allocation2 + $0x48] sm:$0xff] %vm733, %v620
          %744 = vst.msk [vmem:[#allocation2 + $0x50] sm:$0xff] %vm733, %v625
          %745 = vst.msk [vmem:[#allocation2 + $0x58] sm:$0xff] %vm733, %v630
          %746 = vst.msk [vmem:[#allocation2 + $0x60] sm:$0xff] %vm733, %v635
          %747 = vst.msk [vmem:[#allocation2 + $0x68] sm:$0xff] %vm733, %v640
          %748 = vst.msk [vmem:[#allocation2 + $0x70] sm:$0xff] %vm733, %v645
          %749 = vst.msk [vmem:[#allocation2 + $0x78] sm:$0xff] %vm733, %v650
          %750 = vst.msk [vmem:[#allocation2 + $0x80] sm:$0xff] %vm733, %v655
          %751 = vst.msk [vmem:[#allocation2 + $0x88] sm:$0xff] %vm733, %v660
          %752 = vst.msk [vmem:[#allocation2 + $0x90] sm:$0xff] %vm733, %v665
          %753 = vst.msk [vmem:[#allocation2 + $0x98] sm:$0xff] %vm733, %v670
          %754 = vst.msk [vmem:[#allocation2 + $0xa0] sm:$0xff] %vm733, %v675
          %755 = vst.msk [vmem:[#allocation2 + $0xa8] sm:$0xff] %vm733, %v680
          %756 = vst.msk [vmem:[#allocation2 + $0xb0] sm:$0xff] %vm733, %v685
          %757 = vst.msk [vmem:[#allocation2 + $0xb8] sm:$0xff] %vm733, %v690
          %758 = vst.msk [vmem:[#allocation2 + $0xc0] sm:$0xff] %vm733, %v695
          %759 = vst.msk [vmem:[#allocation2 + $0xc8] sm:$0xff] %vm733, %v700
          %760 = vst.msk [vmem:[#allocation2 + $0xd0] sm:$0xff] %vm733, %v705
          %761 = vst.msk [vmem:[#allocation2 + $0xd8] sm:$0xff] %vm733, %v710
          %762 = vst.msk [vmem:[#allocation2 + $0xe0] sm:$0xff] %vm733, %v715
          %763 = vst.msk [vmem:[#allocation2 + $0xe8] sm:$0xff] %vm733, %v720
          %764 = vst.msk [vmem:[#allocation2 + $0xf0] sm:$0xff] %vm733, %v725
          %765 = vst.msk [vmem:[#allocation2 + $0xf8] sm:$0xff] %vm733, %v730
          %v766 = vld [vmem:[#allocation2] ss:$2 sm:$0xff]
          %s767 = scalar_lea.vmem [#allocation2], 16
          %v768 = vld [vmem:[%s767] ss:$2 sm:$0xff]
          %s769 = scalar_lea.vmem [#allocation2], 32
          %v770 = vld [vmem:[%s769] ss:$2 sm:$0xff]
          %s771 = scalar_lea.vmem [#allocation2], 48
          %v772 = vld [vmem:[%s771] ss:$2 sm:$0xff]
          %s773 = scalar_lea.vmem [#allocation2], 64
          %v774 = vld [vmem:[%s773] ss:$2 sm:$0xff]
          %s775 = scalar_lea.vmem [#allocation2], 80
          %v776 = vld [vmem:[%s775] ss:$2 sm:$0xff]
          %s777 = scalar_lea.vmem [#allocation2], 96
          %v778 = vld [vmem:[%s777] ss:$2 sm:$0xff]
          %s779 = scalar_lea.vmem [#allocation2], 112
          %v780 = vld [vmem:[%s779] ss:$2 sm:$0xff]
          %s781 = scalar_lea.vmem [#allocation2], 128
          %v782 = vld [vmem:[%s781] ss:$2 sm:$0xff]
          %s783 = scalar_lea.vmem [#allocation2], 144
          %v784 = vld [vmem:[%s783] ss:$2 sm:$0xff]
          %s785 = scalar_lea.vmem [#allocation2], 160
          %v786 = vld [vmem:[%s785] ss:$2 sm:$0xff]
          %s787 = scalar_lea.vmem [#allocation2], 176
          %v788 = vld [vmem:[%s787] ss:$2 sm:$0xff]
          %s789 = scalar_lea.vmem [#allocation2], 192
          %v790 = vld [vmem:[%s789] ss:$2 sm:$0xff]
          %s791 = scalar_lea.vmem [#allocation2], 208
          %v792 = vld [vmem:[%s791] ss:$2 sm:$0xff]
          %s793 = scalar_lea.vmem [#allocation2], 224
          %v794 = vld [vmem:[%s793] ss:$2 sm:$0xff]
          %s795 = scalar_lea.vmem [#allocation2], 240
          %v796 = vld [vmem:[%s795] ss:$2 sm:$0xff]
          %s797 = scalar_lea.vmem [#allocation2], 1
          %v798 = vld [vmem:[%s797] ss:$2 sm:$0xff]
          %s799 = scalar_lea.vmem [#allocation2], 17
          %v800 = vld [vmem:[%s799] ss:$2 sm:$0xff]
          %s801 = scalar_lea.vmem [#allocation2], 33
          %v802 = vld [vmem:[%s801] ss:$2 sm:$0xff]
          %s803 = scalar_lea.vmem [#allocation2], 49
          %v804 = vld [vmem:[%s803] ss:$2 sm:$0xff]
          %s805 = scalar_lea.vmem [#allocation2], 65
          %v806 = vld [vmem:[%s805] ss:$2 sm:$0xff]
          %s807 = scalar_lea.vmem [#allocation2], 81
          %v808 = vld [vmem:[%s807] ss:$2 sm:$0xff]
          %s809 = scalar_lea.vmem [#allocation2], 97
          %v810 = vld [vmem:[%s809] ss:$2 sm:$0xff]
          %s811 = scalar_lea.vmem [#allocation2], 113
          %v812 = vld [vmem:[%s811] ss:$2 sm:$0xff]
          %s813 = scalar_lea.vmem [#allocation2], 129
          %v814 = vld [vmem:[%s813] ss:$2 sm:$0xff]
          %s815 = scalar_lea.vmem [#allocation2], 145
          %v816 = vld [vmem:[%s815] ss:$2 sm:$0xff]
          %s817 = scalar_lea.vmem [#allocation2], 161
          %v818 = vld [vmem:[%s817] ss:$2 sm:$0xff]
          %s819 = scalar_lea.vmem [#allocation2], 177
          %v820 = vld [vmem:[%s819] ss:$2 sm:$0xff]
          %s821 = scalar_lea.vmem [#allocation2], 193
          %v822 = vld [vmem:[%s821] ss:$2 sm:$0xff]
          %s823 = scalar_lea.vmem [#allocation2], 209
          %v824 = vld [vmem:[%s823] ss:$2 sm:$0xff]
          %s825 = scalar_lea.vmem [#allocation2], 225
          %v826 = vld [vmem:[%s825] ss:$2 sm:$0xff]
          %s827 = scalar_lea.vmem [#allocation2], 241
          %v828 = vld [vmem:[%s827] ss:$2 sm:$0xff]
          %v829 = vmax.f32 %v766, %v798
          %v830 = vmax.f32 %v768, %v800
          %v831 = vmax.f32 %v770, %v802
          %v832 = vmax.f32 %v772, %v804
          %v833 = vmax.f32 %v774, %v806
          %v834 = vmax.f32 %v776, %v808
          %v835 = vmax.f32 %v778, %v810
          %v836 = vmax.f32 %v780, %v812
          %v837 = vmax.f32 %v782, %v814
          %v838 = vmax.f32 %v784, %v816
          %v839 = vmax.f32 %v786, %v818
          %v840 = vmax.f32 %v788, %v820
          %v841 = vmax.f32 %v790, %v822
          %v842 = vmax.f32 %v792, %v824
          %v843 = vmax.f32 %v794, %v826
          %v844 = vmax.f32 %v796, %v828
          %v845 = vmax.f32 %v829, %v830
          %v846 = vmax.f32 %v831, %v832
          %v847 = vmax.f32 %v833, %v834
          %v848 = vmax.f32 %v835, %v836
          %v849 = vmax.f32 %v837, %v838
          %v850 = vmax.f32 %v839, %v840
          %v851 = vmax.f32 %v841, %v842
          %v852 = vmax.f32 %v843, %v844
          %v853 = vld [vmem:[%s4] sm:$0x1]
          %v855 = vlaneseq
          %v856 = vshrl.u32 %v855, 7
          %v857 = vsub.s32 0, %v856
          %v858 = vrot.slane %v853, %v857
          %v860 = vadd.f32 %v845, %v858
          %v861 = vadd.f32 %v846, %v858
          %v862 = vadd.f32 %v847, %v858
          %v863 = vadd.f32 %v848, %v858
          %v864 = vadd.f32 %v849, %v858
          %v865 = vadd.f32 %v850, %v858
          %v866 = vadd.f32 %v851, %v858
          %v867 = vadd.f32 %v852, %v858
          %868 = vst.msk [vmem:[#allocation3] sm:$0xff] %vm733, %v860
          %869 = vst.msk [vmem:[#allocation3 + $0x8] sm:$0xff] %vm733, %v861
          %870 = vst.msk [vmem:[#allocation3 + $0x10] sm:$0xff] %vm733, %v862
          %871 = vst.msk [vmem:[#allocation3 + $0x18] sm:$0xff] %vm733, %v863
          %872 = vst.msk [vmem:[#allocation3 + $0x20] sm:$0xff] %vm733, %v864
          %873 = vst.msk [vmem:[#allocation3 + $0x28] sm:$0xff] %vm733, %v865
          %874 = vst.msk [vmem:[#allocation3 + $0x30] sm:$0xff] %vm733, %v866
          %875 = vst.msk [vmem:[#allocation3 + $0x38] sm:$0xff] %vm733, %v867
          %v876 = vld [vmem:[%s5] sm:$0xf]
          %v878 = vsel %vm408, %v876, 0
          %880 = vmatprep.subr.mxu0 0.0
          %881 = vmatpush1.xpose.msra.mxu0 %v878
          %882 = vmatprep.subr.mxu0 0.0
          %883 = vmatpush1.xpose.msra.mxu0 0.0
          %884 = vmatprep.subr.mxu0 0.0
          %885 = vmatpush1.xpose.msra.mxu0 0.0
          %886 = vmatprep.subr.mxu0 0.0
          %887 = vmatpush1.xpose.msra.mxu0 0.0
          %888 = vmatprep.subr.mxu0 0.0
          %889 = vmatpush1.xpose.msra.mxu0 0.0
          %890 = vmatprep.subr.mxu0 0.0
          %891 = vmatpush1.xpose.msra.mxu0 0.0
          %892 = vmatprep.subr.mxu0 0.0
          %893 = vmatpush1.xpose.msra.mxu0 0.0
          %894 = vmatprep.subr.mxu0 0.0
          %895 = vmatpush1.xpose.msra.mxu0 0.0
          %896 = vmatprep.subr.mxu0 0.0
          %897 = vmatpush1.xpose.msra.mxu0 0.0
          %898 = vmatprep.subr.mxu0 0.0
          %899 = vmatpush1.xpose.msra.mxu0 0.0
          %900 = vmatprep.subr.mxu0 0.0
          %901 = vmatpush1.xpose.msra.mxu0 0.0
          %902 = vmatprep.subr.mxu0 0.0
          %903 = vmatpush1.xpose.msra.mxu0 0.0
          %904 = vmatprep.subr.mxu0 0.0
          %905 = vmatpush1.xpose.msra.mxu0 0.0
          %906 = vmatprep.subr.mxu0 0.0
          %907 = vmatpush1.xpose.msra.mxu0 0.0
          %908 = vmatprep.subr.mxu0 0.0
          %909 = vmatpush1.xpose.msra.mxu0 0.0
          %910 = vmatprep.subr.mxu0 0.0
          %911 = vmatpush1.xpose.msra.mxu0 0.0
          %912 = vmatprep.subr.mxu0 0.0
          %913 = vmatpush1.xpose.msra.mxu0 0.0
          %914 = vmatprep.subr.mxu0 0.0
          %915 = vmatpush1.xpose.msra.mxu0 0.0
          %916 = vmatprep.subr.mxu0 0.0
          %917 = vmatpush1.xpose.msra.mxu0 0.0
          %918 = vmatprep.subr.mxu0 0.0
          %919 = vmatpush1.xpose.msra.mxu0 0.0
          %920 = vmatprep.subr.mxu0 0.0
          %921 = vmatpush1.xpose.msra.mxu0 0.0
          %922 = vmatprep.subr.mxu0 0.0
          %923 = vmatpush1.xpose.msra.mxu0 0.0
          %924 = vmatprep.subr.mxu0 0.0
          %925 = vmatpush1.xpose.msra.mxu0 0.0
          %926 = vmatprep.subr.mxu0 0.0
          %927 = vmatpush1.xpose.msra.mxu0 0.0
          %928 = vmatprep.subr.mxu0 0.0
          %929 = vmatpush1.xpose.msra.mxu0 0.0
          %930 = vmatprep.subr.mxu0 0.0
          %931 = vmatpush1.xpose.msra.mxu0 0.0
          %932 = vmatprep.subr.mxu0 0.0
          %933 = vmatpush1.xpose.msra.mxu0 0.0
          %934 = vmatprep.subr.mxu0 0.0
          %935 = vmatpush1.xpose.msra.mxu0 0.0
          %936 = vmatprep.subr.mxu0 0.0
          %937 = vmatpush1.xpose.msra.mxu0 0.0
          %938 = vmatprep.subr.mxu0 0.0
          %939 = vmatpush1.xpose.msra.mxu0 0.0
          %940 = vmatprep.subr.mxu0 0.0
          %941 = vmatpush1.xpose.msra.mxu0 0.0
          %942 = vmatprep.subr.mxu0 0.0
          %943 = vmatpush1.xpose.msra.mxu0 0.0
          %944 = vmatprep.mubr.f32.mxu0 0.0
          %945 = vmatmul.mubr.f32.gmra.mrb[0].mxu0 %v410
          %v946 = vpop.f32.mrb[0].mxu0
          %v947 = vadd.f32 0.0, %v946
          %v948 = vpop.f32.mrb[0].mxu0
          %949 = vmatprep.mubr.f32.mxu0 0.0
          %950 = vmatmul.mubr.f32.gmra.mrb[0].mxu0 %v413
          %v951 = vpop.f32.mrb[0].mxu0
          %v952 = vadd.f32 0.0, %v951
          %v953 = vpop.f32.mrb[0].mxu0
          %954 = vmatprep.mubr.f32.mxu0 0.0
          %955 = vmatmul.mubr.f32.gmra.mrb[0].mxu0 %v416
          %v956 = vpop.f32.mrb[0].mxu0
          %v957 = vadd.f32 0.0, %v956
          %v958 = vpop.f32.mrb[0].mxu0
          %959 = vmatprep.mubr.f32.mxu0 0.0
          %960 = vmatmul.mubr.f32.gmra.mrb[0].mxu0 %v419
          %v961 = vpop.f32.mrb[0].mxu0
          %v962 = vadd.f32 0.0, %v961
          %v963 = vpop.f32.mrb[0].mxu0
          %964 = vmatprep.mubr.f32.mxu0 0.0
          %965 = vmatmul.mubr.f32.gmra.mrb[0].mxu0 %v422
          %v966 = vpop.f32.mrb[0].mxu0
          %v967 = vadd.f32 0.0, %v966
          %v968 = vpop.f32.mrb[0].mxu0
          %969 = vmatprep.mubr.f32.mxu0 0.0
          %970 = vmatmul.mubr.f32.gmra.mrb[0].mxu0 %v425
          %v971 = vpop.f32.mrb[0].mxu0
          %v972 = vadd.f32 0.0, %v971
          %v973 = vpop.f32.mrb[0].mxu0
          %974 = vmatprep.mubr.f32.mxu0 0.0
          %975 = vmatmul.mubr.f32.gmra.mrb[0].mxu0 %v428
          %v976 = vpop.f32.mrb[0].mxu0
          %v977 = vadd.f32 0.0, %v976
          %v978 = vpop.f32.mrb[0].mxu0
          %979 = vmatprep.mubr.f32.mxu0 0.0
          %980 = vmatmul.mubr.f32.gmra.mrb[0].mxu0 %v431
          %v981 = vpop.f32.mrb[0].mxu0
          %v982 = vadd.f32 0.0, %v981
          %v983 = vpop.f32.mrb[0].mxu0
          %984 = vmatprep.mubr.f32.mxu0 0.0
          %985 = vmatmul.mubr.f32.gmra.mrb[0].mxu0 %v434
          %v986 = vpop.f32.mrb[0].mxu0
          %v987 = vadd.f32 0.0, %v986
          %v988 = vpop.f32.mrb[0].mxu0
          %989 = vmatprep.mubr.f32.mxu0 0.0
          %990 = vmatmul.mubr.f32.gmra.mrb[0].mxu0 %v437
          %v991 = vpop.f32.mrb[0].mxu0
          %v992 = vadd.f32 0.0, %v991
          %v993 = vpop.f32.mrb[0].mxu0
          %994 = vmatprep.mubr.f32.mxu0 0.0
          %995 = vmatmul.mubr.f32.gmra.mrb[0].mxu0 %v440
          %v996 = vpop.f32.mrb[0].mxu0
          %v997 = vadd.f32 0.0, %v996
          %v998 = vpop.f32.mrb[0].mxu0
          %999 = vmatprep.mubr.f32.mxu0 0.0
          %1000 = vmatmul.mubr.f32.gmra.mrb[0].mxu0 %v443
          %v1001 = vpop.f32.mrb[0].mxu0
          %v1002 = vadd.f32 0.0, %v1001
          %v1003 = vpop.f32.mrb[0].mxu0
          %1004 = vmatprep.mubr.f32.mxu0 0.0
          %1005 = vmatmul.mubr.f32.gmra.mrb[0].mxu0 %v446
          %v1006 = vpop.f32.mrb[0].mxu0
          %v1007 = vadd.f32 0.0, %v1006
          %v1008 = vpop.f32.mrb[0].mxu0
          %1009 = vmatprep.mubr.f32.mxu0 0.0
          %1010 = vmatmul.mubr.f32.gmra.mrb[0].mxu0 %v449
          %v1011 = vpop.f32.mrb[0].mxu0
          %v1012 = vadd.f32 0.0, %v1011
          %v1013 = vpop.f32.mrb[0].mxu0
          %1014 = vmatprep.mubr.f32.mxu0 0.0
          %1015 = vmatmul.mubr.f32.gmra.mrb[0].mxu0 %v452
          %v1016 = vpop.f32.mrb[0].mxu0
          %v1017 = vadd.f32 0.0, %v1016
          %v1018 = vpop.f32.mrb[0].mxu0
          %1019 = vmatprep.mubr.f32.mxu0 0.0
          %1020 = vmatmul.mubr.f32.gmra.mrb[0].mxu0 %v455
          %v1021 = vpop.f32.mrb[0].mxu0
          %v1022 = vadd.f32 0.0, %v1021
          %v1023 = vpop.f32.mrb[0].mxu0
          %1024 = vmatprep.mubr.f32.mxu0 0.0
          %1025 = vmatmul.mubr.f32.gmra.mrb[0].mxu0 %v458
          %v1026 = vpop.f32.mrb[0].mxu0
          %v1027 = vadd.f32 0.0, %v1026
          %v1028 = vpop.f32.mrb[0].mxu0
          %1029 = vmatprep.mubr.f32.mxu0 0.0
          %1030 = vmatmul.mubr.f32.gmra.mrb[0].mxu0 %v461
          %v1031 = vpop.f32.mrb[0].mxu0
          %v1032 = vadd.f32 0.0, %v1031
          %v1033 = vpop.f32.mrb[0].mxu0
          %1034 = vmatprep.mubr.f32.mxu0 0.0
          %1035 = vmatmul.mubr.f32.gmra.mrb[0].mxu0 %v464
          %v1036 = vpop.f32.mrb[0].mxu0
          %v1037 = vadd.f32 0.0, %v1036
          %v1038 = vpop.f32.mrb[0].mxu0
          %1039 = vmatprep.mubr.f32.mxu0 0.0
          %1040 = vmatmul.mubr.f32.gmra.mrb[0].mxu0 %v467
          %v1041 = vpop.f32.mrb[0].mxu0
          %v1042 = vadd.f32 0.0, %v1041
          %v1043 = vpop.f32.mrb[0].mxu0
          %1044 = vmatprep.mubr.f32.mxu0 0.0
          %1045 = vmatmul.mubr.f32.gmra.mrb[0].mxu0 %v470
          %v1046 = vpop.f32.mrb[0].mxu0
          %v1047 = vadd.f32 0.0, %v1046
          %v1048 = vpop.f32.mrb[0].mxu0
          %1049 = vmatprep.mubr.f32.mxu0 0.0
          %1050 = vmatmul.mubr.f32.gmra.mrb[0].mxu0 %v473
          %v1051 = vpop.f32.mrb[0].mxu0
          %v1052 = vadd.f32 0.0, %v1051
          %v1053 = vpop.f32.mrb[0].mxu0
          %1054 = vmatprep.mubr.f32.mxu0 0.0
          %1055 = vmatmul.mubr.f32.gmra.mrb[0].mxu0 %v476
          %v1056 = vpop.f32.mrb[0].mxu0
          %v1057 = vadd.f32 0.0, %v1056
          %v1058 = vpop.f32.mrb[0].mxu0
          %1059 = vmatprep.mubr.f32.mxu0 0.0
          %1060 = vmatmul.mubr.f32.gmra.mrb[0].mxu0 %v479
          %v1061 = vpop.f32.mrb[0].mxu0
          %v1062 = vadd.f32 0.0, %v1061
          %v1063 = vpop.f32.mrb[0].mxu0
          %1064 = vmatprep.mubr.f32.mxu0 0.0
          %1065 = vmatmul.mubr.f32.gmra.mrb[0].mxu0 %v482
          %v1066 = vpop.f32.mrb[0].mxu0
          %v1067 = vadd.f32 0.0, %v1066
          %v1068 = vpop.f32.mrb[0].mxu0
          %1069 = vmatprep.mubr.f32.mxu0 0.0
          %1070 = vmatmul.mubr.f32.gmra.mrb[0].mxu0 %v485
          %v1071 = vpop.f32.mrb[0].mxu0
          %v1072 = vadd.f32 0.0, %v1071
          %v1073 = vpop.f32.mrb[0].mxu0
          %1074 = vmatprep.mubr.f32.mxu0 0.0
          %1075 = vmatmul.mubr.f32.gmra.mrb[0].mxu0 %v488
          %v1076 = vpop.f32.mrb[0].mxu0
          %v1077 = vadd.f32 0.0, %v1076
          %v1078 = vpop.f32.mrb[0].mxu0
          %1079 = vmatprep.mubr.f32.mxu0 0.0
          %1080 = vmatmul.mubr.f32.gmra.mrb[0].mxu0 %v491
          %v1081 = vpop.f32.mrb[0].mxu0
          %v1082 = vadd.f32 0.0, %v1081
          %v1083 = vpop.f32.mrb[0].mxu0
          %1084 = vmatprep.mubr.f32.mxu0 0.0
          %1085 = vmatmul.mubr.f32.gmra.mrb[0].mxu0 %v494
          %v1086 = vpop.f32.mrb[0].mxu0
          %v1087 = vadd.f32 0.0, %v1086
          %v1088 = vpop.f32.mrb[0].mxu0
          %1089 = vmatprep.mubr.f32.mxu0 0.0
          %1090 = vmatmul.mubr.f32.gmra.mrb[0].mxu0 %v497
          %v1091 = vpop.f32.mrb[0].mxu0
          %v1092 = vadd.f32 0.0, %v1091
          %v1093 = vpop.f32.mrb[0].mxu0
          %1094 = vmatprep.mubr.f32.mxu0 0.0
          %1095 = vmatmul.mubr.f32.gmra.mrb[0].mxu0 %v500
          %v1096 = vpop.f32.mrb[0].mxu0
          %v1097 = vadd.f32 0.0, %v1096
          %v1098 = vpop.f32.mrb[0].mxu0
          %1099 = vmatprep.mubr.f32.mxu0 0.0
          %1100 = vmatmul.mubr.f32.gmra.mrb[0].mxu0 %v503
          %v1101 = vpop.f32.mrb[0].mxu0
          %v1102 = vadd.f32 0.0, %v1101
          %v1103 = vpop.f32.mrb[0].mxu0
          %1104 = vdwg.mxu0
          %1105 = vst.msk [vmem:[#allocation2] sm:$0xff] %vm733, %v947
          %1106 = vst.msk [vmem:[#allocation2 + $0x8] sm:$0xff] %vm733, %v952
          %1107 = vst.msk [vmem:[#allocation2 + $0x10] sm:$0xff] %vm733, %v957
          %1108 = vst.msk [vmem:[#allocation2 + $0x18] sm:$0xff] %vm733, %v962
          %1109 = vst.msk [vmem:[#allocation2 + $0x20] sm:$0xff] %vm733, %v967
          %1110 = vst.msk [vmem:[#allocation2 + $0x28] sm:$0xff] %vm733, %v972
          %1111 = vst.msk [vmem:[#allocation2 + $0x30] sm:$0xff] %vm733, %v977
          %1112 = vst.msk [vmem:[#allocation2 + $0x38] sm:$0xff] %vm733, %v982
          %1113 = vst.msk [vmem:[#allocation2 + $0x40] sm:$0xff] %vm733, %v987
          %1114 = vst.msk [vmem:[#allocation2 + $0x48] sm:$0xff] %vm733, %v992
          %1115 = vst.msk [vmem:[#allocation2 + $0x50] sm:$0xff] %vm733, %v997
          %1116 = vst.msk [vmem:[#allocation2 + $0x58] sm:$0xff] %vm733, %v1002
          %1117 = vst.msk [vmem:[#allocation2 + $0x60] sm:$0xff] %vm733, %v1007
          %1118 = vst.msk [vmem:[#allocation2 + $0x68] sm:$0xff] %vm733, %v1012
          %1119 = vst.msk [vmem:[#allocation2 + $0x70] sm:$0xff] %vm733, %v1017
          %1120 = vst.msk [vmem:[#allocation2 + $0x78] sm:$0xff] %vm733, %v1022
          %1121 = vst.msk [vmem:[#allocation2 + $0x80] sm:$0xff] %vm733, %v1027
          %1122 = vst.msk [vmem:[#allocation2 + $0x88] sm:$0xff] %vm733, %v1032
          %1123 = vst.msk [vmem:[#allocation2 + $0x90] sm:$0xff] %vm733, %v1037
          %1124 = vst.msk [vmem:[#allocation2 + $0x98] sm:$0xff] %vm733, %v1042
          %1125 = vst.msk [vmem:[#allocation2 + $0xa0] sm:$0xff] %vm733, %v1047
          %1126 = vst.msk [vmem:[#allocation2 + $0xa8] sm:$0xff] %vm733, %v1052
          %1127 = vst.msk [vmem:[#allocation2 + $0xb0] sm:$0xff] %vm733, %v1057
          %1128 = vst.msk [vmem:[#allocation2 + $0xb8] sm:$0xff] %vm733, %v1062
          %1129 = vst.msk [vmem:[#allocation2 + $0xc0] sm:$0xff] %vm733, %v1067
          %1130 = vst.msk [vmem:[#allocation2 + $0xc8] sm:$0xff] %vm733, %v1072
          %1131 = vst.msk [vmem:[#allocation2 + $0xd0] sm:$0xff] %vm733, %v1077
          %1132 = vst.msk [vmem:[#allocation2 + $0xd8] sm:$0xff] %vm733, %v1082
          %1133 = vst.msk [vmem:[#allocation2 + $0xe0] sm:$0xff] %vm733, %v1087
          %1134 = vst.msk [vmem:[#allocation2 + $0xe8] sm:$0xff] %vm733, %v1092
          %1135 = vst.msk [vmem:[#allocation2 + $0xf0] sm:$0xff] %vm733, %v1097
          %1136 = vst.msk [vmem:[#allocation2 + $0xf8] sm:$0xff] %vm733, %v1102
          %v1137 = vld [vmem:[#allocation2] ss:$2 sm:$0xff]
          %v1138 = vld [vmem:[%s767] ss:$2 sm:$0xff]
          %v1139 = vld [vmem:[%s769] ss:$2 sm:$0xff]
          %v1140 = vld [vmem:[%s771] ss:$2 sm:$0xff]
          %v1141 = vld [vmem:[%s773] ss:$2 sm:$0xff]
          %v1142 = vld [vmem:[%s775] ss:$2 sm:$0xff]
          %v1143 = vld [vmem:[%s777] ss:$2 sm:$0xff]
          %v1144 = vld [vmem:[%s779] ss:$2 sm:$0xff]
          %v1145 = vld [vmem:[%s781] ss:$2 sm:$0xff]
          %v1146 = vld [vmem:[%s783] ss:$2 sm:$0xff]
          %v1147 = vld [vmem:[%s785] ss:$2 sm:$0xff]
          %v1148 = vld [vmem:[%s787] ss:$2 sm:$0xff]
          %v1149 = vld [vmem:[%s789] ss:$2 sm:$0xff]
          %v1150 = vld [vmem:[%s791] ss:$2 sm:$0xff]
          %v1151 = vld [vmem:[%s793] ss:$2 sm:$0xff]
          %v1152 = vld [vmem:[%s795] ss:$2 sm:$0xff]
          %v1153 = vld [vmem:[%s797] ss:$2 sm:$0xff]
          %v1154 = vld [vmem:[%s799] ss:$2 sm:$0xff]
          %v1155 = vld [vmem:[%s801] ss:$2 sm:$0xff]
          %v1156 = vld [vmem:[%s803] ss:$2 sm:$0xff]
          %v1157 = vld [vmem:[%s805] ss:$2 sm:$0xff]
          %v1158 = vld [vmem:[%s807] ss:$2 sm:$0xff]
          %v1159 = vld [vmem:[%s809] ss:$2 sm:$0xff]
          %v1160 = vld [vmem:[%s811] ss:$2 sm:$0xff]
          %v1161 = vld [vmem:[%s813] ss:$2 sm:$0xff]
          %v1162 = vld [vmem:[%s815] ss:$2 sm:$0xff]
          %v1163 = vld [vmem:[%s817] ss:$2 sm:$0xff]
          %v1164 = vld [vmem:[%s819] ss:$2 sm:$0xff]
          %v1165 = vld [vmem:[%s821] ss:$2 sm:$0xff]
          %v1166 = vld [vmem:[%s823] ss:$2 sm:$0xff]
          %v1167 = vld [vmem:[%s825] ss:$2 sm:$0xff]
          %v1168 = vld [vmem:[%s827] ss:$2 sm:$0xff]
          %v1169 = vmax.f32 %v1137, %v1153
          %v1170 = vmax.f32 %v1138, %v1154
          %v1171 = vmax.f32 %v1139, %v1155
          %v1172 = vmax.f32 %v1140, %v1156
          %v1173 = vmax.f32 %v1141, %v1157
          %v1174 = vmax.f32 %v1142, %v1158
          %v1175 = vmax.f32 %v1143, %v1159
          %v1176 = vmax.f32 %v1144, %v1160
          %v1177 = vmax.f32 %v1145, %v1161
          %v1178 = vmax.f32 %v1146, %v1162
          %v1179 = vmax.f32 %v1147, %v1163
          %v1180 = vmax.f32 %v1148, %v1164
          %v1181 = vmax.f32 %v1149, %v1165
          %v1182 = vmax.f32 %v1150, %v1166
          %v1183 = vmax.f32 %v1151, %v1167
          %v1184 = vmax.f32 %v1152, %v1168
          %v1185 = vmax.f32 %v1169, %v1170
          %v1186 = vmax.f32 %v1171, %v1172
          %v1187 = vmax.f32 %v1173, %v1174
          %v1188 = vmax.f32 %v1175, %v1176
          %v1189 = vmax.f32 %v1177, %v1178
          %v1190 = vmax.f32 %v1179, %v1180
          %v1191 = vmax.f32 %v1181, %v1182
          %v1192 = vmax.f32 %v1183, %v1184
          %v1193 = vld [vmem:[%s6] sm:$0xff]
          %v1195 = vsel %vm733, %v1193, 0
          %v1198 = vsel %vm733, %v1185, 0
          %v1201 = vsel %vm733, %v1186, 0
          %v1204 = vsel %vm733, %v1187, 0
          %v1207 = vsel %vm733, %v1188, 0
          %v1210 = vsel %vm733, %v1189, 0
          %v1213 = vsel %vm733, %v1190, 0
          %v1216 = vsel %vm733, %v1191, 0
          %v1219 = vsel %vm733, %v1192, 0
          %1221 = vmatprep.subr.mxu0 0.0
          %1222 = vmatpush1.xpose.msra.mxu0 %v1198
          %1223 = vmatprep.subr.mxu0 0.0
          %1224 = vmatpush1.xpose.msra.mxu0 %v1201
          %1225 = vmatprep.subr.mxu0 0.0
          %1226 = vmatpush1.xpose.msra.mxu0 %v1204
          %1227 = vmatprep.subr.mxu0 0.0
          %1228 = vmatpush1.xpose.msra.mxu0 %v1207
          %1229 = vmatprep.subr.mxu0 0.0
          %1230 = vmatpush1.xpose.msra.mxu0 %v1210
          %1231 = vmatprep.subr.mxu0 0.0
          %1232 = vmatpush1.xpose.msra.mxu0 %v1213
          %1233 = vmatprep.subr.mxu0 0.0
          %1234 = vmatpush1.xpose.msra.mxu0 %v1216
          %1235 = vmatprep.subr.mxu0 0.0
          %1236 = vmatpush1.xpose.msra.mxu0 %v1219
          %1237 = vmatprep.subr.mxu0 0.0
          %1238 = vmatpush1.xpose.msra.mxu0 0.0
          %1239 = vmatprep.subr.mxu0 0.0
          %1240 = vmatpush1.xpose.msra.mxu0 0.0
          %1241 = vmatprep.subr.mxu0 0.0
          %1242 = vmatpush1.xpose.msra.mxu0 0.0
          %1243 = vmatprep.subr.mxu0 0.0
          %1244 = vmatpush1.xpose.msra.mxu0 0.0
          %1245 = vmatprep.subr.mxu0 0.0
          %1246 = vmatpush1.xpose.msra.mxu0 0.0
          %1247 = vmatprep.subr.mxu0 0.0
          %1248 = vmatpush1.xpose.msra.mxu0 0.0
          %1249 = vmatprep.subr.mxu0 0.0
          %1250 = vmatpush1.xpose.msra.mxu0 0.0
          %1251 = vmatprep.subr.mxu0 0.0
          %1252 = vmatpush1.xpose.msra.mxu0 0.0
          %1253 = vmatprep.subr.mxu0 0.0
          %1254 = vmatpush1.xpose.msra.mxu0 0.0
          %1255 = vmatprep.subr.mxu0 0.0
          %1256 = vmatpush1.xpose.msra.mxu0 0.0
          %1257 = vmatprep.subr.mxu0 0.0
          %1258 = vmatpush1.xpose.msra.mxu0 0.0
          %1259 = vmatprep.subr.mxu0 0.0
          %1260 = vmatpush1.xpose.msra.mxu0 0.0
          %1261 = vmatprep.subr.mxu0 0.0
          %1262 = vmatpush1.xpose.msra.mxu0 0.0
          %1263 = vmatprep.subr.mxu0 0.0
          %1264 = vmatpush1.xpose.msra.mxu0 0.0
          %1265 = vmatprep.subr.mxu0 0.0
          %1266 = vmatpush1.xpose.msra.mxu0 0.0
          %1267 = vmatprep.subr.mxu0 0.0
          %1268 = vmatpush1.xpose.msra.mxu0 0.0
          %1269 = vmatprep.subr.mxu0 0.0
          %1270 = vmatpush1.xpose.msra.mxu0 0.0
          %1271 = vmatprep.subr.mxu0 0.0
          %1272 = vmatpush1.xpose.msra.mxu0 0.0
          %1273 = vmatprep.subr.mxu0 0.0
          %1274 = vmatpush1.xpose.msra.mxu0 0.0
          %1275 = vmatprep.subr.mxu0 0.0
          %1276 = vmatpush1.xpose.msra.mxu0 0.0
          %1277 = vmatprep.subr.mxu0 0.0
          %1278 = vmatpush1.xpose.msra.mxu0 0.0
          %1279 = vmatprep.subr.mxu0 0.0
          %1280 = vmatpush1.xpose.msra.mxu0 0.0
          %1281 = vmatprep.subr.mxu0 0.0
          %1282 = vmatpush1.xpose.msra.mxu0 0.0
          %1283 = vmatprep.subr.mxu0 0.0
          %1284 = vmatpush1.xpose.msra.mxu0 0.0
          %1285 = vmatprep.mubr.f32.mxu0 0.0
          %1286 = vmatmul.mubr.f32.gmra.mrb[0].mxu0 %v1195
          %v1287 = vpop.f32.mrb[0].mxu0
          %v1288 = vadd.f32 0.0, %v1287
          %v1289 = vpop.f32.mrb[0].mxu0
          %1290 = vdwg.mxu0
          %vm1291 = vcmask 523264
          %1292 = vst.msk [vmem:[#allocation4] sm:$0xff] %vm1291, %v1288
        $region60: #{tpu_custom_call.1} parent=51 // pred_fallthru
          _
        %s1293 = smul.u32 %s30, 256
        %s1294 = sshra.s32 %s1293, 7
        %s1295 = sand.u32 %s1293, 127
        %s1296 = smul.addr %s1294, 8
        %s1297 = scalar_lea.vmem %s303, %s1296 [#allocation5]
        %v1298 = vld [vmem:[%s1297] sm:$0xff]
        %v1299 = vld [vmem:[%s1297 + $0x8] sm:$0xff]
        %v1300 = vld [vmem:[%s1] sm:$0xf]
        %v1301 = vld [vmem:[%s2] sm:$0xf]
        %1303 = vset.pattern.permute.xlu0 0
        %1304 = vperm.xlu0 %1303, %v1301
        %v1305 = vpop.permute.xlu0 %1304
        %vm1307 = vcmask 64512
        %v1309 = vsel %vm1307, %v1300, 0
        %1311 = vmatprep.subr.mxu0 %v1299
        %1312 = vmatpush1.msra.mxu0 %v1298
        %1313 = vmatprep.subr.mxu0 0.0
        %1314 = vmatpush1.msra.mxu0 0.0
        %1315 = vmatprep.subr.mxu0 0.0
        %1316 = vmatpush1.msra.mxu0 0.0
        %1317 = vmatprep.subr.mxu0 0.0
        %1318 = vmatpush1.msra.mxu0 0.0
        %1319 = vmatprep.subr.mxu0 0.0
        %1320 = vmatpush1.msra.mxu0 0.0
        %1321 = vmatprep.subr.mxu0 0.0
        %1322 = vmatpush1.msra.mxu0 0.0
        %1323 = vmatprep.subr.mxu0 0.0
        %1324 = vmatpush1.msra.mxu0 0.0
        %1325 = vmatprep.subr.mxu0 0.0
        %1326 = vmatpush1.msra.mxu0 0.0
        %1327 = vmatprep.subr.mxu0 0.0
        %1328 = vmatpush1.msra.mxu0 0.0
        %1329 = vmatprep.subr.mxu0 0.0
        %1330 = vmatpush1.msra.mxu0 0.0
        %1331 = vmatprep.subr.mxu0 0.0
        %1332 = vmatpush1.msra.mxu0 0.0
        %1333 = vmatprep.subr.mxu0 0.0
        %1334 = vmatpush1.msra.mxu0 0.0
        %1335 = vmatprep.subr.mxu0 0.0
        %1336 = vmatpush1.msra.mxu0 0.0
        %1337 = vmatprep.subr.mxu0 0.0
        %1338 = vmatpush1.msra.mxu0 0.0
        %1339 = vmatprep.subr.mxu0 0.0
        %1340 = vmatpush1.msra.mxu0 0.0
        %1341 = vmatprep.subr.mxu0 0.0
        %1342 = vmatpush1.msra.mxu0 0.0
        %1343 = vmatprep.subr.mxu0 0.0
        %1344 = vmatpush1.msra.mxu0 0.0
        %1345 = vmatprep.subr.mxu0 0.0
        %1346 = vmatpush1.msra.mxu0 0.0
        %1347 = vmatprep.subr.mxu0 0.0
        %1348 = vmatpush1.msra.mxu0 0.0
        %1349 = vmatprep.subr.mxu0 0.0
        %1350 = vmatpush1.msra.mxu0 0.0
        %1351 = vmatprep.subr.mxu0 0.0
        %1352 = vmatpush1.msra.mxu0 0.0
        %1353 = vmatprep.subr.mxu0 0.0
        %1354 = vmatpush1.msra.mxu0 0.0
        %1355 = vmatprep.subr.mxu0 0.0
        %1356 = vmatpush1.msra.mxu0 0.0
        %1357 = vmatprep.subr.mxu0 0.0
        %1358 = vmatpush1.msra.mxu0 0.0
        %1359 = vmatprep.subr.mxu0 0.0
        %1360 = vmatpush1.msra.mxu0 0.0
        %1361 = vmatprep.subr.mxu0 0.0
        %1362 = vmatpush1.msra.mxu0 0.0
        %1363 = vmatprep.subr.mxu0 0.0
        %1364 = vmatpush1.msra.mxu0 0.0
        %1365 = vmatprep.subr.mxu0 0.0
        %1366 = vmatpush1.msra.mxu0 0.0
        %1367 = vmatprep.subr.mxu0 0.0
        %1368 = vmatpush1.msra.mxu0 0.0
        %1369 = vmatprep.subr.mxu0 0.0
        %1370 = vmatpush1.msra.mxu0 0.0
        %1371 = vmatprep.subr.mxu0 0.0
        %1372 = vmatpush1.msra.mxu0 0.0
        %1373 = vmatprep.subr.mxu0 0.0
        %1374 = vmatpush1.msra.mxu0 0.0
        %1375 = vmatprep.mubr.f32.mxu0 0.0
        %1376 = vmatmul.mubr.f32.gmra.mrb[0].mxu0 %v1309
        %v1377 = vpop.f32.mrb[0].mxu0
        %v1378 = vadd.f32 %v1305, %v1377
        %v1379 = vpop.f32.mrb[0].mxu0
        %v1380 = vadd.f32 %v1305, %v1379
        %1381 = vdwg.mxu0
        %v1382 = vld [vmem:[#allocation3] sm:$0xff]
        %v1383 = vld [vmem:[#allocation3 + $0x8] sm:$0xff]
        %v1384 = vld [vmem:[#allocation3 + $0x10] sm:$0xff]
        %v1385 = vld [vmem:[#allocation3 + $0x18] sm:$0xff]
        %v1386 = vld [vmem:[#allocation3 + $0x20] sm:$0xff]
        %v1387 = vld [vmem:[#allocation3 + $0x28] sm:$0xff]
        %v1388 = vld [vmem:[#allocation3 + $0x30] sm:$0xff]
        %v1389 = vld [vmem:[#allocation3 + $0x38] sm:$0xff]
        %vm1390 = vcmask 31744
        %v1392 = vsel %vm1390, %v1382, 0
        %v1395 = vsel %vm1390, %v1383, 0
        %v1398 = vsel %vm1390, %v1384, 0
        %v1401 = vsel %vm1390, %v1385, 0
        %v1404 = vsel %vm1390, %v1386, 0
        %v1407 = vsel %vm1390, %v1387, 0
        %v1410 = vsel %vm1390, %v1388, 0
        %v1413 = vsel %vm1390, %v1389, 0
        %vm1415 = vcmask 1043456
        %v1417 = vsel %vm1415, %v1378, 0
        %v1420 = vsel %vm1415, %v1380, 0
        %1422 = vmatprep.subr.mxu0 %v1420
        %1423 = vmatpush1.msra.mxu0 %v1417
        %1424 = vmatprep.subr.mxu0 0.0
        %1425 = vmatpush1.msra.mxu0 0.0
        %1426 = vmatprep.subr.mxu0 0.0
        %1427 = vmatpush1.msra.mxu0 0.0
        %1428 = vmatprep.subr.mxu0 0.0
        %1429 = vmatpush1.msra.mxu0 0.0
        %1430 = vmatprep.subr.mxu0 0.0
        %1431 = vmatpush1.msra.mxu0 0.0
        %1432 = vmatprep.subr.mxu0 0.0
        %1433 = vmatpush1.msra.mxu0 0.0
        %1434 = vmatprep.subr.mxu0 0.0
        %1435 = vmatpush1.msra.mxu0 0.0
        %1436 = vmatprep.subr.mxu0 0.0
        %1437 = vmatpush1.msra.mxu0 0.0
        %1438 = vmatprep.subr.mxu0 0.0
        %1439 = vmatpush1.msra.mxu0 0.0
        %1440 = vmatprep.subr.mxu0 0.0
        %1441 = vmatpush1.msra.mxu0 0.0
        %1442 = vmatprep.subr.mxu0 0.0
        %1443 = vmatpush1.msra.mxu0 0.0
        %1444 = vmatprep.subr.mxu0 0.0
        %1445 = vmatpush1.msra.mxu0 0.0
        %1446 = vmatprep.subr.mxu0 0.0
        %1447 = vmatpush1.msra.mxu0 0.0
        %1448 = vmatprep.subr.mxu0 0.0
        %1449 = vmatpush1.msra.mxu0 0.0
        %1450 = vmatprep.subr.mxu0 0.0
        %1451 = vmatpush1.msra.mxu0 0.0
        %1452 = vmatprep.subr.mxu0 0.0
        %1453 = vmatpush1.msra.mxu0 0.0
        %1454 = vmatprep.subr.mxu0 0.0
        %1455 = vmatpush1.msra.mxu0 0.0
        %1456 = vmatprep.subr.mxu0 0.0
        %1457 = vmatpush1.msra.mxu0 0.0
        %1458 = vmatprep.subr.mxu0 0.0
        %1459 = vmatpush1.msra.mxu0 0.0
        %1460 = vmatprep.subr.mxu0 0.0
        %1461 = vmatpush1.msra.mxu0 0.0
        %1462 = vmatprep.subr.mxu0 0.0
        %1463 = vmatpush1.msra.mxu0 0.0
        %1464 = vmatprep.subr.mxu0 0.0
        %1465 = vmatpush1.msra.mxu0 0.0
        %1466 = vmatprep.subr.mxu0 0.0
        %1467 = vmatpush1.msra.mxu0 0.0
        %1468 = vmatprep.subr.mxu0 0.0
        %1469 = vmatpush1.msra.mxu0 0.0
        %1470 = vmatprep.subr.mxu0 0.0
        %1471 = vmatpush1.msra.mxu0 0.0
        %1472 = vmatprep.subr.mxu0 0.0
        %1473 = vmatpush1.msra.mxu0 0.0
        %1474 = vmatprep.subr.mxu0 0.0
        %1475 = vmatpush1.msra.mxu0 0.0
        %1476 = vmatprep.subr.mxu0 0.0
        %1477 = vmatpush1.msra.mxu0 0.0
        %1478 = vmatprep.subr.mxu0 0.0
        %1479 = vmatpush1.msra.mxu0 0.0
        %1480 = vmatprep.subr.mxu0 0.0
        %1481 = vmatpush1.msra.mxu0 0.0
        %1482 = vmatprep.subr.mxu0 0.0
        %1483 = vmatpush1.msra.mxu0 0.0
        %1484 = vmatprep.subr.mxu0 0.0
        %1485 = vmatpush1.msra.mxu0 0.0
        %1486 = vmatprep.mubr.f32.mxu0 0.0
        %1487 = vmatmul.mubr.f32.gmra.mrb[0].mxu0 %v1392
        %v1488 = vpop.f32.mrb[0].mxu0
        %v1489 = vadd.f32 0.0, %v1488
        %v1490 = vpop.f32.mrb[0].mxu0
        %v1491 = vadd.f32 0.0, %v1490
        %1492 = vmatprep.mubr.f32.mxu0 0.0
        %1493 = vmatmul.mubr.f32.gmra.mrb[0].mxu0 %v1395
        %v1494 = vpop.f32.mrb[0].mxu0
        %v1495 = vadd.f32 0.0, %v1494
        %v1496 = vpop.f32.mrb[0].mxu0
        %v1497 = vadd.f32 0.0, %v1496
        %1498 = vmatprep.mubr.f32.mxu0 0.0
        %1499 = vmatmul.mubr.f32.gmra.mrb[0].mxu0 %v1398
        %v1500 = vpop.f32.mrb[0].mxu0
        %v1501 = vadd.f32 0.0, %v1500
        %v1502 = vpop.f32.mrb[0].mxu0
        %v1503 = vadd.f32 0.0, %v1502
        %1504 = vmatprep.mubr.f32.mxu0 0.0
        %1505 = vmatmul.mubr.f32.gmra.mrb[0].mxu0 %v1401
        %v1506 = vpop.f32.mrb[0].mxu0
        %v1507 = vadd.f32 0.0, %v1506
        %v1508 = vpop.f32.mrb[0].mxu0
        %v1509 = vadd.f32 0.0, %v1508
        %1510 = vmatprep.mubr.f32.mxu0 0.0
        %1511 = vmatmul.mubr.f32.gmra.mrb[0].mxu0 %v1404
        %v1512 = vpop.f32.mrb[0].mxu0
        %v1513 = vadd.f32 0.0, %v1512
        %v1514 = vpop.f32.mrb[0].mxu0
        %v1515 = vadd.f32 0.0, %v1514
        %1516 = vmatprep.mubr.f32.mxu0 0.0
        %1517 = vmatmul.mubr.f32.gmra.mrb[0].mxu0 %v1407
        %v1518 = vpop.f32.mrb[0].mxu0
        %v1519 = vadd.f32 0.0, %v1518
        %v1520 = vpop.f32.mrb[0].mxu0
        %v1521 = vadd.f32 0.0, %v1520
        %1522 = vmatprep.mubr.f32.mxu0 0.0
        %1523 = vmatmul.mubr.f32.gmra.mrb[0].mxu0 %v1410
        %v1524 = vpop.f32.mrb[0].mxu0
        %v1525 = vadd.f32 0.0, %v1524
        %v1526 = vpop.f32.mrb[0].mxu0
        %v1527 = vadd.f32 0.0, %v1526
        %1528 = vmatprep.mubr.f32.mxu0 0.0
        %1529 = vmatmul.mubr.f32.gmra.mrb[0].mxu0 %v1413
        %v1530 = vpop.f32.mrb[0].mxu0
        %v1531 = vadd.f32 0.0, %v1530
        %v1532 = vpop.f32.mrb[0].mxu0
        %v1533 = vadd.f32 0.0, %v1532
        %1534 = vdwg.mxu0
        %v1535 = vmax.f32 %v1489, %v1501
        %v1536 = vmax.f32 %v1495, %v1507
        %v1537 = vmax.f32 %v1535, %v1513
        %v1538 = vmax.f32 %v1536, %v1519
        %v1539 = vmax.f32 %v1537, %v1525
        %v1540 = vmax.f32 %v1538, %v1531
        %v1541 = vmax.f32 %v1539, %v1540
        %v1542 = vrot.slane %v1541, 4
        %v1543 = vmax.f32 %v1541, %v1542
        %v1544 = vrot.slane %v1543, 2
        %v1545 = vmax.f32 %v1543, %v1544
        %v1546 = vrot.slane %v1545, 1
        %v1547 = vmax.f32 %v1545, %v1546
        %v1548 = vmax.f32 %v1491, %v1503
        %v1549 = vmax.f32 %v1497, %v1509
        %v1550 = vmax.f32 %v1548, %v1515
        %v1551 = vmax.f32 %v1549, %v1521
        %v1552 = vmax.f32 %v1550, %v1527
        %v1553 = vmax.f32 %v1551, %v1533
        %v1554 = vmax.f32 %v1552, %v1553
        %v1555 = vrot.slane %v1554, 4
        %v1556 = vmax.f32 %v1554, %v1555
        %v1557 = vrot.slane %v1556, 2
        %v1558 = vmax.f32 %v1556, %v1557
        %v1559 = vrot.slane %v1558, 1
        %v1560 = vmax.f32 %v1558, %v1559
        %v1561 = vsub.f32 %v1489, %v1547
        %v1562 = vsub.f32 %v1491, %v1560
        %v1563 = vsub.f32 %v1495, %v1547
        %v1564 = vsub.f32 %v1497, %v1560
        %v1565 = vsub.f32 %v1501, %v1547
        %v1566 = vsub.f32 %v1503, %v1560
        %v1567 = vsub.f32 %v1507, %v1547
        %v1568 = vsub.f32 %v1509, %v1560
        %v1569 = vsub.f32 %v1513, %v1547
        %v1570 = vsub.f32 %v1515, %v1560
        %v1571 = vsub.f32 %v1519, %v1547
        %v1572 = vsub.f32 %v1521, %v1560
        %v1573 = vsub.f32 %v1525, %v1547
        %v1574 = vsub.f32 %v1527, %v1560
        %v1575 = vsub.f32 %v1531, %v1547
        %v1576 = vsub.f32 %v1533, %v1560
        %v1577 = vmul.f32 %v1561, 1.442695
        %v1578 = vpow.pop %v1577
        %v1579 = vmul.f32 %v1562, 1.442695
        %v1580 = vpow.pop %v1579
        %v1581 = vmul.f32 %v1563, 1.442695
        %v1582 = vpow.pop %v1581
        %v1583 = vmul.f32 %v1564, 1.442695
        %v1584 = vpow.pop %v1583
        %v1585 = vmul.f32 %v1565, 1.442695
        %v1586 = vpow.pop %v1585
        %v1587 = vmul.f32 %v1566, 1.442695
        %v1588 = vpow.pop %v1587
        %v1589 = vmul.f32 %v1567, 1.442695
        %v1590 = vpow.pop %v1589
        %v1591 = vmul.f32 %v1568, 1.442695
        %v1592 = vpow.pop %v1591
        %v1593 = vmul.f32 %v1569, 1.442695
        %v1594 = vpow.pop %v1593
        %v1595 = vmul.f32 %v1570, 1.442695
        %v1596 = vpow.pop %v1595
        %v1597 = vmul.f32 %v1571, 1.442695
        %v1598 = vpow.pop %v1597
        %v1599 = vmul.f32 %v1572, 1.442695
        %v1600 = vpow.pop %v1599
        %v1601 = vmul.f32 %v1573, 1.442695
        %v1602 = vpow.pop %v1601
        %v1603 = vmul.f32 %v1574, 1.442695
        %v1604 = vpow.pop %v1603
        %v1605 = vmul.f32 %v1575, 1.442695
        %v1606 = vpow.pop %v1605
        %v1607 = vmul.f32 %v1576, 1.442695
        %v1608 = vpow.pop %v1607
        %v1609 = vadd.f32 %v1578, %v1582
        %v1610 = vadd.f32 %v1609, %v1586
        %v1611 = vadd.f32 %v1610, %v1590
        %v1612 = vadd.f32 %v1611, %v1594
        %v1613 = vadd.f32 %v1612, %v1598
        %v1614 = vadd.f32 %v1613, %v1602
        %v1615 = vadd.f32 %v1614, %v1606
        %v1616 = vrot.slane %v1615, 4
        %v1617 = vadd.f32 %v1615, %v1616
        %v1618 = vrot.slane %v1617, 2
        %v1619 = vadd.f32 %v1617, %v1618
        %v1620 = vrot.slane %v1619, 1
        %v1621 = vadd.f32 %v1619, %v1620
        %v1622 = vadd.f32 %v1580, %v1584
        %v1623 = vadd.f32 %v1622, %v1588
        %v1624 = vadd.f32 %v1623, %v1592
        %v1625 = vadd.f32 %v1624, %v1596
        %v1626 = vadd.f32 %v1625, %v1600
        %v1627 = vadd.f32 %v1626, %v1604
        %v1628 = vadd.f32 %v1627, %v1608
        %v1629 = vrot.slane %v1628, 4
        %v1630 = vadd.f32 %v1628, %v1629
        %v1631 = vrot.slane %v1630, 2
        %v1632 = vadd.f32 %v1630, %v1631
        %v1633 = vrot.slane %v1632, 1
        %v1634 = vadd.f32 %v1632, %v1633
        %v1635 = vrcp.pop %v1621
        %v1636 = vrcp.pop %v1634
        %v1637 = vmul.f32 %v1621, %v1635
        %v1638 = vmul.f32 %v1634, %v1636
        %v1639 = vsub.f32 2.0, %v1637
        %v1640 = vsub.f32 2.0, %v1638
        %v1641 = vmul.f32 %v1635, %v1639
        %v1642 = vmul.f32 %v1636, %v1640
        %v1643 = vld [vmem:[#allocation4] sm:$0xff]
        %vm1644 = vcmask 523264
        %v1646 = vsel %vm1644, %v1643, 0
        %1648 = vmatprep.subr.mxu0 %v1580
        %1649 = vmatpush1.msra.mxu0 %v1578
        %1650 = vmatprep.subr.mxu0 %v1584
        %1651 = vmatpush1.msra.mxu0 %v1582
        %1652 = vmatprep.subr.mxu0 %v1588
        %1653 = vmatpush1.msra.mxu0 %v1586
        %1654 = vmatprep.subr.mxu0 %v1592
        %1655 = vmatpush1.msra.mxu0 %v1590
        %1656 = vmatprep.subr.mxu0 %v1596
        %1657 = vmatpush1.msra.mxu0 %v1594
        %1658 = vmatprep.subr.mxu0 %v1600
        %1659 = vmatpush1.msra.mxu0 %v1598
        %1660 = vmatprep.subr.mxu0 %v1604
        %1661 = vmatpush1.msra.mxu0 %v1602
        %1662 = vmatprep.subr.mxu0 %v1608
        %1663 = vmatpush1.msra.mxu0 %v1606
        %1664 = vmatprep.subr.mxu0 0.0
        %1665 = vmatpush1.msra.mxu0 0.0
        %1666 = vmatprep.subr.mxu0 0.0
        %1667 = vmatpush1.msra.mxu0 0.0
        %1668 = vmatprep.subr.mxu0 0.0
        %1669 = vmatpush1.msra.mxu0 0.0
        %1670 = vmatprep.subr.mxu0 0.0
        %1671 = vmatpush1.msra.mxu0 0.0
        %1672 = vmatprep.subr.mxu0 0.0
        %1673 = vmatpush1.msra.mxu0 0.0
        %1674 = vmatprep.subr.mxu0 0.0
        %1675 = vmatpush1.msra.mxu0 0.0
        %1676 = vmatprep.subr.mxu0 0.0
        %1677 = vmatpush1.msra.mxu0 0.0
        %1678 = vmatprep.subr.mxu0 0.0
        %1679 = vmatpush1.msra.mxu0 0.0
        %1680 = vmatprep.subr.mxu0 0.0
        %1681 = vmatpush1.msra.mxu0 0.0
        %1682 = vmatprep.subr.mxu0 0.0
        %1683 = vmatpush1.msra.mxu0 0.0
        %1684 = vmatprep.subr.mxu0 0.0
        %1685 = vmatpush1.msra.mxu0 0.0
        %1686 = vmatprep.subr.mxu0 0.0
        %1687 = vmatpush1.msra.mxu0 0.0
        %1688 = vmatprep.subr.mxu0 0.0
        %1689 = vmatpush1.msra.mxu0 0.0
        %1690 = vmatprep.subr.mxu0 0.0
        %1691 = vmatpush1.msra.mxu0 0.0
        %1692 = vmatprep.subr.mxu0 0.0
        %1693 = vmatpush1.msra.mxu0 0.0
        %1694 = vmatprep.subr.mxu0 0.0
        %1695 = vmatpush1.msra.mxu0 0.0
        %1696 = vmatprep.subr.mxu0 0.0
        %1697 = vmatpush1.msra.mxu0 0.0
        %1698 = vmatprep.subr.mxu0 0.0
        %1699 = vmatpush1.msra.mxu0 0.0
        %1700 = vmatprep.subr.mxu0 0.0
        %1701 = vmatpush1.msra.mxu0 0.0
        %1702 = vmatprep.subr.mxu0 0.0
        %1703 = vmatpush1.msra.mxu0 0.0
        %1704 = vmatprep.subr.mxu0 0.0
        %1705 = vmatpush1.msra.mxu0 0.0
        %1706 = vmatprep.subr.mxu0 0.0
        %1707 = vmatpush1.msra.mxu0 0.0
        %1708 = vmatprep.subr.mxu0 0.0
        %1709 = vmatpush1.msra.mxu0 0.0
        %1710 = vmatprep.subr.mxu0 0.0
        %1711 = vmatpush1.msra.mxu0 0.0
        %1712 = vmatprep.mubr.f32.mxu0 0.0
        %1713 = vmatmul.mubr.f32.gmra.mrb[0].mxu0 %v1646
        %v1714 = vpop.f32.mrb[0].mxu0
        %v1715 = vadd.f32 0.0, %v1714
        %v1716 = vpop.f32.mrb[0].mxu0
        %v1717 = vadd.f32 0.0, %v1716
        %1718 = vdwg.mxu0
        %v1719 = vmul.f32 %v1715, %v1641
        %v1720 = vmul.f32 %v1717, %v1642
        %v1721 = vld [vmem:[%s7] sm:$0xff]
        %1723 = vset.pattern.permute.xlu0 0
        %1724 = vperm.xlu0 %1723, %v1721
        %v1725 = vpop.permute.xlu0 %1724
        %v1727 = vadd.f32 %v1719, %v1725
        %v1728 = vadd.f32 %v1720, %v1725
        %v1729 = vadd.f32 %v1727, %v1298
        %v1730 = vadd.f32 %v1728, %v1299
        %1731 = vst [vmem:[%s335] sm:$0xff] %v1729
        %1732 = vst [vmem:[%s335 + $0x8] sm:$0xff] %v1730
        %s1733 = sand.u32 %s220, 1
        %s1734 = scalar_lea.sflag [#allocation7], %s1733
        %s1735 = sand.u32 %s220, 1
        %s1736 = smul.addr %s1735, 16
        %s1737 = scalar_lea.vmem [#allocation8], %s1736
        // Predicated region
        $region61: #{tpu_custom_call.1} parent=51 // pred_check
          %p1738 = pneg %p230
        $region62: #{tpu_custom_call.1} parent=51 // pred_check_branch
          %1740 = sbr.rel (%p1738) target = $region64
        $region63: #{tpu_custom_call.1} parent=51 // pred_region
          %s1741 = smul.u32 2, %s30
          %s1743 = ssub.s32 256, 256
          %1744 = vsyncadd %s1734, %s1743
          %s1745 = smul.addr %s29, 2
          %s1746 = sadd.s32 %s1741, %s1745
          %s1747 = smul.addr %s1746, 128
          %s1748 = scalar_lea.hbm %s8, %s1747
          %s1750 = sshll.u32 %s1737, 4
          %s1751 = int_to_ptr.vmem [resolvable:$true] %s1750
          %1753 = dma.vmem_to_hbm [thread:$0]  %s1751, 256, %s1748, %s1734
        $region64: #{tpu_custom_call.1} parent=51 // pred_fallthru
          _
      $region52: #{tpu_custom_call.1} parent=5 // pred_fallthru
        _
      %p1754 = scmp.le.s32.totalorder 2, %s20
      // Predicated region
      $region65: #{tpu_custom_call.1} parent=5 // pred_check
        %p1755 = pneg %p1754
      $region66: #{tpu_custom_call.1} parent=5 // pred_check_branch
        %1757 = sbr.rel (%p1755) target = $region68
      $region67: #{tpu_custom_call.1} parent=5 // pred_region
        %s1758 = ssub.s32 %s20, 2
        // Predicated region
        $region69: #{tpu_custom_call.1} parent=67 // pred_check
          %p1759 = pneg %p236
        $region70: #{tpu_custom_call.1} parent=67 // pred_check_branch
          %1761 = sbr.rel (%p1759) target = $region72
        $region71: #{tpu_custom_call.1} parent=67 // pred_region
          %s1762 = sand.u32 %s221, 1
          %s1763 = scalar_lea.sflag [#allocation7], %s1762
          %s1764 = sand.u32 %s221, 1
          %s1765 = smul.addr %s1764, 16
          %s1766 = scalar_lea.vmem [#allocation8], %s1765
          %1767 = dma.done %s1763, 256
        $region72: #{tpu_custom_call.1} parent=67 // pred_fallthru
          _
      $region68: #{tpu_custom_call.1} parent=5 // pred_fallthru
        _
    $region6: #{tpu_custom_call.1} parent=1 // loop_footer
      %s24 = sadd.s32 1, %s20
    $region7: #{tpu_custom_call.1} parent=1 // loop_footer_branch
      %19 = sbr.rel target = $region3
    $region8: #{tpu_custom_call.1} parent=1 // loop_exit
      _
    %1768 = vsyncpa [#allocation6], 1
    %s1769 = scalar_lea.sflag [#allocation6], 1
    %1770 = vsyncpa %s1769, 1
    %1771 = vsyncpa [#allocation7], 1
    %s1772 = scalar_lea.sflag [#allocation7], 1
    %1773 = vsyncpa %s1772, 1

</llo_original>
